<compile_context>
chip_gen: v5e
topology: v5e:2x2
jax: 0.10.0
libtpu: 0.0.40
codegen_flags: <defaults>
</compile_context>

<pallas_src>
import functools

import jax
import jax.numpy as jnp
import numpy as np
from jax import lax
from jax.experimental import pallas as pl
from jax.experimental.pallas import tpu as pltpu

_NEG_BIG = -1e30          # finite stand-in for -inf pool padding; every 3x3/s2 window
                          # overlaps at least one real element (H, W even), so it never
                          # leaks into the output.
_MM_DTYPE = jnp.bfloat16  # MXU operand dtype (accumulation stays f32)


# ----------------------------------------------------------------------------
# fused kernel: conv+bias -> maxpool -> resnet1 -> resnet1  (per batch block)
# ----------------------------------------------------------------------------
def _convnet_block_kernel(x_ref, w0_ref, b0_ref, w1_ref, b1_ref, w2_ref, b2_ref,
                          o_ref, *, Nb, H, W, Ho, Wo, Cin, C):
    WCin = W * Cin
    WoC = Wo * C

    # ---- stage 1: conv3x3 (pad=1) + bias as 3 banded matmuls ----------------
    # H zero-padding = two concatenated zero rows; W zero-padding is baked into the
    # band weights (out-of-range taps simply have no row in the band matrix).
    zx = jnp.zeros((Nb, 1, WCin), jnp.float32)
    xp = jnp.concatenate([zx, x_ref[...], zx], axis=1).astype(_MM_DTYPE)  # (Nb, H+2, WCin)
    y0 = jnp.zeros((Nb * H, 3 * WoC), jnp.float32)
    for i in range(3):
        lhs = xp[:, i:i + H, :].reshape(Nb * H, WCin)
        y0 = y0 + jnp.dot(lhs, w0_ref[i], preferred_element_type=jnp.float32)
    y0 = y0 + b0_ref[...]          # columns: [even x | odd x | odd x shifted right]

    # ---- stage 2: maxpool 3x3, stride 2, pad 1 ------------------------------
    # W direction: window for output xo is {2xo-1, 2xo, 2xo+1} == the three aligned
    # 64-lane blocks of y0 (the shifted block already holds -1e30 at xo==0).
    pw = jnp.maximum(jnp.maximum(y0[:, :WoC], y0[:, WoC:2 * WoC]), y0[:, 2 * WoC:])
    # H direction: subsample rows into (even, odd) pairs before reducing.
    pw = pw.reshape(Nb, Ho, 2, WoC)
    even, odd = pw[:, :, 0, :], pw[:, :, 1, :]                   # rows 2yo / 2yo+1
    up = jnp.concatenate(                                        # rows 2yo-1 (-inf pad)
        [jnp.full((Nb, 1, WoC), _NEG_BIG, jnp.float32), odd[:, :Ho - 1, :]], axis=1)
    pooled = jnp.maximum(jnp.maximum(even, odd), up)             # (Nb, Ho, WoC)

    # ---- stage 3: resnet1 applied twice --------------------------------------
    zr = jnp.zeros((Nb, 1, WoC), jnp.float32)

    def conv_band(a, w_ref):                                     # a: (Nb*Ho, WoC) f32
        ap = jnp.concatenate(
            [zr, a.reshape(Nb, Ho, WoC), zr], axis=1).astype(_MM_DTYPE)  # (Nb, Ho+2, WoC)
        out = jnp.zeros((Nb * Ho, WoC), jnp.float32)
        for i in range(3):
            lhs = ap[:, i:i + Ho, :].reshape(Nb * Ho, WoC)
            out = out + jnp.dot(lhs, w_ref[i], preferred_element_type=jnp.float32)
        return out

    b1 = jnp.broadcast_to(b1_ref[...], (Nb * Ho, WoC))           # hoisted bias rows
    b2 = jnp.broadcast_to(b2_ref[...], (Nb * Ho, WoC))

    z = pooled.reshape(Nb * Ho, WoC)
    for _ in range(2):
        # nn.ReLU(inplace=True) at the head of `seq` rewrites the residual tensor in
        # the PyTorch module, so the skip connection carries relu(z).
        a = jnp.maximum(z, 0.0)
        h = jnp.maximum(conv_band(a, w1_ref) + b1, 0.0)
        z = a + conv_band(h, w2_ref) + b2

    # lane-dense-ish store: (Nb, Ho, Wo*C) rows (64 lanes; the 4-D unfold is wrapper-side)
    o_ref[...] = z.reshape(Nb, Ho, WoC).astype(o_ref.dtype)


# ----------------------------------------------------------------------------
# wrappers: banded weight construction, batch blocking, pallas_call plumbing
# ----------------------------------------------------------------------------
def _band_weight(w_oihw, out_x, width):
    """3x3 'same' conv (pad=1) folded along W into 3 banded matmul weights.

    w_oihw : (O, I, 3, 3) conv weight (PyTorch OIHW layout)
    out_x  : source spatial column for each output column block (-1 => all-zero block)
    width  : spatial width of the (unpadded) input rows
    returns (3, width*I, len(out_x)*O) bf16; slice [i] contracts input row y-1+i.
    """
    O, I = int(w_oihw.shape[0]), int(w_oihw.shape[1])
    M = len(out_x)
    P = np.zeros((3, width, M), np.float32)
    for m, x in enumerate(out_x):
        if x < 0:
            continue
        for j in range(3):
            u = x + j - 1                       # zero padding => just skip OOB taps
            if 0 <= u < width:
                P[j, u, m] = 1.0
    band = jnp.einsum("jum,ocij->iucmo", P, w_oihw.astype(jnp.float32))
    return band.reshape(3, width * I, M * O).astype(_MM_DTYPE)


def _num_tensorcores():
    """TensorCores per chip (target grid-step count); default 1 if unknown."""
    try:
        kind = jax.devices()[0].device_kind.lower()
    except Exception:
        return 1
    return 2 if any(t in kind for t in ("v4", "v5p", "v7", "7x")) else 1


def _pick_batch_block(n, h, w, cin, c, vmem_budget=8 << 20):
    """Images per grid step: one fat step per TensorCore, capped by a VMEM budget."""
    per_image = 4 * (h * w * cin + h * 3 * (w // 2) * c + 4 * (h // 2) * (w // 2) * c)
    cap = max(1, min(n, vmem_budget // max(per_image, 1)))
    tc = _num_tensorcores()
    nb = n // tc if n % tc == 0 else n
    nb = min(nb, cap)
    while n % nb:
        nb -= 1
    return max(nb, 1)


def convnet_block_forward_nhwc(x_nhwc, p, *, batch_block=None):
    """Fused _ConvNetBlock forward, NHWC in / NHWC out (preferred layout on TPU)."""
    N, H, W, Cin = x_nhwc.shape
    C = int(p["w0"].shape[0])
    assert H % 2 == 0 and W % 2 == 0, "kernel assumes even spatial dims"
    Ho, Wo = H // 2, W // 2
    Nb = _pick_batch_block(N, H, W, Cin, C) if batch_block is None else batch_block
    assert N % Nb == 0, "batch block must divide batch size"

    # conv0 band weights emit [even x | odd x | odd x shifted] column blocks so the
    # W direction of the 3x3/s2 maxpool reduces to two aligned maxes in the kernel.
    out_x0 = ([2 * xo for xo in range(Wo)] +
              [2 * xo + 1 for xo in range(Wo)] +
              [2 * xo - 1 if xo > 0 else -1 for xo in range(Wo)])
    w0 = _band_weight(p["w0"], out_x0, W)                         # (3, W*Cin, 3*Wo*C)
    b0 = jnp.tile(p["b0"].astype(jnp.float32), 3 * Wo)
    b0 = b0.at[2 * Wo * C:(2 * Wo + 1) * C].set(_NEG_BIG).reshape(1, 3 * Wo * C)

    out_xr = list(range(Wo))
    w1 = _band_weight(p["r1_w1"], out_xr, Wo)                     # (3, Wo*C, Wo*C)
    b1 = jnp.tile(p["r1_b1"].astype(jnp.float32), Wo).reshape(1, Wo * C)
    w2 = _band_weight(p["r1_w2"], out_xr, Wo)
    b2 = jnp.tile(p["r1_b2"].astype(jnp.float32), Wo).reshape(1, Wo * C)

    x3 = x_nhwc.reshape(N, H, W * Cin)                            # fold W into lanes

    kern = functools.partial(_convnet_block_kernel,
                             Nb=Nb, H=H, W=W, Ho=Ho, Wo=Wo, Cin=Cin, C=C)

    out = pl.pallas_call(
        kern,
        out_shape=jax.ShapeDtypeStruct((N, Ho, Wo * C), x_nhwc.dtype),
        grid_spec=pltpu.PrefetchScalarGridSpec(
            num_scalar_prefetch=0,
            grid=(N // Nb,),
            in_specs=[
                pl.BlockSpec((Nb, H, W * Cin), lambda n: (n, 0, 0)),
                pl.BlockSpec((3, W * Cin, 3 * Wo * C), lambda n: (0, 0, 0)),
                pl.BlockSpec((1, 3 * Wo * C), lambda n: (0, 0)),
                pl.BlockSpec((3, Wo * C, Wo * C), lambda n: (0, 0, 0)),
                pl.BlockSpec((1, Wo * C), lambda n: (0, 0)),
                pl.BlockSpec((3, Wo * C, Wo * C), lambda n: (0, 0, 0)),
                pl.BlockSpec((1, Wo * C), lambda n: (0, 0)),
            ],
            out_specs=pl.BlockSpec((Nb, Ho, Wo * C), lambda n: (n, 0, 0)),
        ),
        compiler_params=pltpu.CompilerParams(dimension_semantics=("parallel",)),
        # TODO(synk): at production feature-map sizes, set vmem_limit_bytes and add an
        # H-halo grid axis; at these IMPALA sizes everything fits comfortably in VMEM.
    )(x3, w0, b0, w1, b1, w2, b2)

    return out.reshape(N, Ho, Wo, C)


def convnet_block_forward(x_nchw, p, *, batch_block=None):
    """NCHW in / NCHW out wrapper matching the PyTorch module interface."""
    x = jnp.transpose(x_nchw, (0, 2, 3, 1))                       # NCHW -> NHWC
    y = convnet_block_forward_nhwc(x, p, batch_block=batch_block)
    return jnp.transpose(y, (0, 3, 1, 2))                         # NHWC -> NCHW


# ----------------------------------------------------------------------------
# parameter init (deterministic, shapes from the module __init__)
# ----------------------------------------------------------------------------
def init_params(key, in_ch, num_ch):
    def conv_param(k, cin, cout):
        kw, kb = jax.random.split(k)
        bound = 1.0 / np.sqrt(cin * 9)
        w = jax.random.uniform(kw, (cout, cin, 3, 3), jnp.float32, -bound, bound)
        b = jax.random.uniform(kb, (cout,), jnp.float32, -bound, bound)
        return w, b

    ks = jax.random.split(key, 5)
    p = {}
    p["w0"], p["b0"] = conv_param(ks[0], in_ch, num_ch)
    p["r1_w1"], p["r1_b1"] = conv_param(ks[1], num_ch, num_ch)
    p["r1_w2"], p["r1_b2"] = conv_param(ks[2], num_ch, num_ch)
    # resnet2 parameters exist in the module but are never used in forward.
    p["r2_w1"], p["r2_b1"] = conv_param(ks[3], num_ch, num_ch)
    p["r2_w2"], p["r2_b2"] = conv_param(ks[4], num_ch, num_ch)
    return p


# ----------------------------------------------------------------------------
# pure-JAX reference (matches PyTorch forward, incl. inplace-ReLU residual aliasing;
# matmul_dtype mirrors the kernel's bf16 MXU operands)
# ----------------------------------------------------------------------------
def reference_forward(x, p, *, matmul_dtype=jnp.float32):
    def conv(z, w, b):
        y = lax.conv_general_dilated(
            z.astype(matmul_dtype), w.astype(matmul_dtype), (1, 1), ((1, 1), (1, 1)),
            dimension_numbers=("NCHW", "OIHW", "NCHW"),
            preferred_element_type=jnp.float32)
        return y + b.reshape(1, -1, 1, 1)

    def maxpool(z):
        return lax.reduce_window(z, -jnp.inf, lax.max,
                                 (1, 1, 3, 3), (1, 1, 2, 2),
                                 ((0, 0), (0, 0), (1, 1), (1, 1)))

    def resnet(z, w1, b1, w2, b2):
        # nn.ReLU(inplace=True) is the first op of `seq`, so it also rewrites the
        # tensor used by the `x += seq(x)` skip connection: residual = relu(z).
        a = jax.nn.relu(z)
        h = conv(a, w1, b1)
        h = conv(jax.nn.relu(h), w2, b2)
        return a + h

    y = maxpool(conv(x, p["w0"], p["b0"]))
    y = resnet(y, p["r1_w1"], p["r1_b1"], p["r1_w2"], p["r1_b2"])
    y = resnet(y, p["r1_w1"], p["r1_b1"], p["r1_w2"], p["r1_b2"])
    return y


# ----------------------------------------------------------------------------
if __name__ == "__main__":
    key = jax.random.PRNGKey(0)
    kx, kp = jax.random.split(key)

    # small demo shapes (N=4 so dual-TensorCore parts still get 2 parallel steps)
    N, Cin, H, W = 4, 4, 16, 16
    num_ch = 8

    x = jax.random.normal(kx, (N, Cin, H, W), jnp.float32)
    params = init_params(kp, Cin, num_ch)

    out = jax.block_until_ready(jax.jit(convnet_block_forward)(x, params))

    # reference with matching bf16 matmul operands / f32 accumulation
    ref = jax.block_until_ready(reference_forward(x, params, matmul_dtype=_MM_DTYPE))

    assert out.shape == (N, num_ch, H // 2, W // 2), out.shape
    max_err = float(np.max(np.abs(np.asarray(out) - np.asarray(ref))))
    assert np.allclose(np.asarray(out), np.asarray(ref), atol=1e-2, rtol=1e-2), max_err

    print("KERNEL_OK")
</pallas_src>

<mosaic_0001>
module attributes {stable_mosaic.version = 11 : i64} {
  func.func @_convnet_block_kernel(%arg0: i32, %arg1: memref<4x16x64xf32, #tpu.memory_space<vmem>>, %arg2: memref<3x64x192xbf16, #tpu.memory_space<vmem>>, %arg3: memref<1x192xf32, #tpu.memory_space<vmem>>, %arg4: memref<3x64x64xbf16, #tpu.memory_space<vmem>>, %arg5: memref<1x64xf32, #tpu.memory_space<vmem>>, %arg6: memref<3x64x64xbf16, #tpu.memory_space<vmem>>, %arg7: memref<1x64xf32, #tpu.memory_space<vmem>>, %arg8: memref<4x8x64xf32, #tpu.memory_space<vmem>>) attributes {dimension_semantics = [#tpu.dimension_semantics<parallel>], iteration_bounds = array<i64: 1>, scalar_prefetch = 0 : i64, scratch_operands = 0 : i64, tpu.core_type = #tpu.core_type<tc>, window_params = [{transform_indices = @transform_0, window_bounds = array<i64: 4, 16, 64>}, {pipeline_mode = #tpu.pipeline_mode<synchronous>, transform_indices = @transform_1, window_bounds = array<i64: 3, 64, 192>}, {pipeline_mode = #tpu.pipeline_mode<synchronous>, transform_indices = @transform_2, window_bounds = array<i64: 1, 192>}, {pipeline_mode = #tpu.pipeline_mode<synchronous>, transform_indices = @transform_3, window_bounds = array<i64: 3, 64, 64>}, {pipeline_mode = #tpu.pipeline_mode<synchronous>, transform_indices = @transform_4, window_bounds = array<i64: 1, 64>}, {pipeline_mode = #tpu.pipeline_mode<synchronous>, transform_indices = @transform_5, window_bounds = array<i64: 3, 64, 64>}, {pipeline_mode = #tpu.pipeline_mode<synchronous>, transform_indices = @transform_6, window_bounds = array<i64: 1, 64>}, {transform_indices = @transform_7, window_bounds = array<i64: 4, 8, 64>}]} {
    %cst = arith.constant 0.000000e+00 : f32
    %0 = vector.broadcast %cst : f32 to vector<4x1x64xf32>
    %c0 = arith.constant 0 : index
    %c0_0 = arith.constant 0 : index
    %c0_1 = arith.constant 0 : index
    %1 = vector.load %arg1[%c0, %c0_0, %c0_1] : memref<4x16x64xf32, #tpu.memory_space<vmem>>, vector<4x16x64xf32>
    %2 = tpu.concatenate %0, %1, %0 in 1 : vector<4x1x64xf32>, vector<4x16x64xf32>, vector<4x1x64xf32> -> vector<4x18x64xf32>
    %3 = arith.truncf %2 : vector<4x18x64xf32> to vector<4x18x64xbf16>
    %cst_2 = arith.constant 0.000000e+00 : f32
    %4 = vector.broadcast %cst_2 : f32 to vector<64x192xf32>
    %5 = vector.extract_strided_slice %3 {offsets = [0, 0, 0], sizes = [4, 16, 64], strides = [1, 1, 1]} : vector<4x18x64xbf16> to vector<4x16x64xbf16>
    %6 = vector.shape_cast %5 : vector<4x16x64xbf16> to vector<64x64xbf16>
    %c0_3 = arith.constant 0 : index
    %c0_4 = arith.constant 0 : index
    %c0_5 = arith.constant 0 : index
    %7 = vector.load %arg2[%c0_3, %c0_4, %c0_5] : memref<3x64x192xbf16, #tpu.memory_space<vmem>>, vector<1x64x192xbf16>
    %8 = vector.shape_cast %7 : vector<1x64x192xbf16> to vector<64x192xbf16>
    %cst_6 = arith.constant dense<0.000000e+00> : vector<64x192xf32>
    %9 = tpu.matmul %6, %8, %cst_6 {dimension_numbers = #tpu.dot_dimension_numbers<[1], [0], [0], [1], [0, 0, 1, 1], [], []>} : vector<64x64xbf16>, vector<64x192xbf16>, vector<64x192xf32> -> vector<64x192xf32>
    %10 = arith.addf %4, %9 : vector<64x192xf32>
    %11 = vector.extract_strided_slice %3 {offsets = [0, 1, 0], sizes = [4, 16, 64], strides = [1, 1, 1]} : vector<4x18x64xbf16> to vector<4x16x64xbf16>
    %12 = vector.shape_cast %11 : vector<4x16x64xbf16> to vector<64x64xbf16>
    %c1 = arith.constant 1 : index
    %c0_7 = arith.constant 0 : index
    %c0_8 = arith.constant 0 : index
    %13 = vector.load %arg2[%c1, %c0_7, %c0_8] : memref<3x64x192xbf16, #tpu.memory_space<vmem>>, vector<1x64x192xbf16>
    %14 = vector.shape_cast %13 : vector<1x64x192xbf16> to vector<64x192xbf16>
    %cst_9 = arith.constant dense<0.000000e+00> : vector<64x192xf32>
    %15 = tpu.matmul %12, %14, %cst_9 {dimension_numbers = #tpu.dot_dimension_numbers<[1], [0], [0], [1], [0, 0, 1, 1], [], []>} : vector<64x64xbf16>, vector<64x192xbf16>, vector<64x192xf32> -> vector<64x192xf32>
    %16 = arith.addf %10, %15 : vector<64x192xf32>
    %17 = vector.extract_strided_slice %3 {offsets = [0, 2, 0], sizes = [4, 16, 64], strides = [1, 1, 1]} : vector<4x18x64xbf16> to vector<4x16x64xbf16>
    %18 = vector.shape_cast %17 : vector<4x16x64xbf16> to vector<64x64xbf16>
    %c2 = arith.constant 2 : index
    %c0_10 = arith.constant 0 : index
    %c0_11 = arith.constant 0 : index
    %19 = vector.load %arg2[%c2, %c0_10, %c0_11] : memref<3x64x192xbf16, #tpu.memory_space<vmem>>, vector<1x64x192xbf16>
    %20 = vector.shape_cast %19 : vector<1x64x192xbf16> to vector<64x192xbf16>
    %cst_12 = arith.constant dense<0.000000e+00> : vector<64x192xf32>
    %21 = tpu.matmul %18, %20, %cst_12 {dimension_numbers = #tpu.dot_dimension_numbers<[1], [0], [0], [1], [0, 0, 1, 1], [], []>} : vector<64x64xbf16>, vector<64x192xbf16>, vector<64x192xf32> -> vector<64x192xf32>
    %22 = arith.addf %16, %21 : vector<64x192xf32>
    %c0_13 = arith.constant 0 : index
    %c0_14 = arith.constant 0 : index
    %23 = vector.load %arg3[%c0_13, %c0_14] : memref<1x192xf32, #tpu.memory_space<vmem>>, vector<1x192xf32>
    %24 = vector.broadcast %23 : vector<1x192xf32> to vector<64x192xf32>
    %25 = arith.addf %22, %24 : vector<64x192xf32>
    %26 = vector.extract_strided_slice %25 {offsets = [0, 0], sizes = [64, 64], strides = [1, 1]} : vector<64x192xf32> to vector<64x64xf32>
    %27 = vector.extract_strided_slice %25 {offsets = [0, 64], sizes = [64, 64], strides = [1, 1]} : vector<64x192xf32> to vector<64x64xf32>
    %28 = arith.maximumf %26, %27 : vector<64x64xf32>
    %29 = vector.extract_strided_slice %25 {offsets = [0, 128], sizes = [64, 64], strides = [1, 1]} : vector<64x192xf32> to vector<64x64xf32>
    %30 = arith.maximumf %28, %29 : vector<64x64xf32>
    %31 = vector.shape_cast %30 : vector<64x64xf32> to vector<4x8x2x64xf32>
    %32 = vector.extract_strided_slice %31 {offsets = [0, 0, 0, 0], sizes = [4, 8, 1, 64], strides = [1, 1, 1, 1]} : vector<4x8x2x64xf32> to vector<4x8x1x64xf32>
    %33 = vector.shape_cast %32 : vector<4x8x1x64xf32> to vector<4x8x64xf32>
    %34 = vector.extract_strided_slice %31 {offsets = [0, 0, 1, 0], sizes = [4, 8, 1, 64], strides = [1, 1, 1, 1]} : vector<4x8x2x64xf32> to vector<4x8x1x64xf32>
    %35 = vector.shape_cast %34 : vector<4x8x1x64xf32> to vector<4x8x64xf32>
    %cst_15 = arith.constant -1.000000e+30 : f32
    %36 = vector.broadcast %cst_15 : f32 to vector<4x1x64xf32>
    %37 = vector.extract_strided_slice %35 {offsets = [0, 0, 0], sizes = [4, 7, 64], strides = [1, 1, 1]} : vector<4x8x64xf32> to vector<4x7x64xf32>
    %38 = tpu.concatenate %36, %37 in 1 : vector<4x1x64xf32>, vector<4x7x64xf32> -> vector<4x8x64xf32>
    %39 = arith.maximumf %33, %35 : vector<4x8x64xf32>
    %40 = arith.maximumf %39, %38 : vector<4x8x64xf32>
    %cst_16 = arith.constant 0.000000e+00 : f32
    %41 = vector.broadcast %cst_16 : f32 to vector<4x1x64xf32>
    %c0_17 = arith.constant 0 : index
    %c0_18 = arith.constant 0 : index
    %42 = vector.load %arg5[%c0_17, %c0_18] : memref<1x64xf32, #tpu.memory_space<vmem>>, vector<1x64xf32>
    %43 = vector.shape_cast %42 : vector<1x64xf32> to vector<1x64xf32>
    %44 = vector.broadcast %43 : vector<1x64xf32> to vector<32x64xf32>
    %c0_19 = arith.constant 0 : index
    %c0_20 = arith.constant 0 : index
    %45 = vector.load %arg7[%c0_19, %c0_20] : memref<1x64xf32, #tpu.memory_space<vmem>>, vector<1x64xf32>
    %46 = vector.shape_cast %45 : vector<1x64xf32> to vector<1x64xf32>
    %47 = vector.broadcast %46 : vector<1x64xf32> to vector<32x64xf32>
    %48 = vector.shape_cast %40 : vector<4x8x64xf32> to vector<32x64xf32>
    %cst_21 = arith.constant 0.000000e+00 : f32
    %49 = vector.broadcast %cst_21 : f32 to vector<32x64xf32>
    %50 = arith.maximumf %48, %49 : vector<32x64xf32>
    %51 = vector.shape_cast %50 : vector<32x64xf32> to vector<4x8x64xf32>
    %52 = tpu.concatenate %41, %51, %41 in 1 : vector<4x1x64xf32>, vector<4x8x64xf32>, vector<4x1x64xf32> -> vector<4x10x64xf32>
    %53 = arith.truncf %52 : vector<4x10x64xf32> to vector<4x10x64xbf16>
    %cst_22 = arith.constant 0.000000e+00 : f32
    %54 = vector.broadcast %cst_22 : f32 to vector<32x64xf32>
    %55 = vector.extract_strided_slice %53 {offsets = [0, 0, 0], sizes = [4, 8, 64], strides = [1, 1, 1]} : vector<4x10x64xbf16> to vector<4x8x64xbf16>
    %56 = vector.shape_cast %55 : vector<4x8x64xbf16> to vector<32x64xbf16>
    %c0_23 = arith.constant 0 : index
    %c0_24 = arith.constant 0 : index
    %c0_25 = arith.constant 0 : index
    %57 = vector.load %arg4[%c0_23, %c0_24, %c0_25] : memref<3x64x64xbf16, #tpu.memory_space<vmem>>, vector<1x64x64xbf16>
    %58 = vector.shape_cast %57 : vector<1x64x64xbf16> to vector<64x64xbf16>
    %cst_26 = arith.constant dense<0.000000e+00> : vector<32x64xf32>
    %59 = tpu.matmul %56, %58, %cst_26 {dimension_numbers = #tpu.dot_dimension_numbers<[1], [0], [0], [1], [0, 0, 1, 1], [], []>} : vector<32x64xbf16>, vector<64x64xbf16>, vector<32x64xf32> -> vector<32x64xf32>
    %60 = arith.addf %54, %59 : vector<32x64xf32>
    %61 = vector.extract_strided_slice %53 {offsets = [0, 1, 0], sizes = [4, 8, 64], strides = [1, 1, 1]} : vector<4x10x64xbf16> to vector<4x8x64xbf16>
    %62 = vector.shape_cast %61 : vector<4x8x64xbf16> to vector<32x64xbf16>
    %c1_27 = arith.constant 1 : index
    %c0_28 = arith.constant 0 : index
    %c0_29 = arith.constant 0 : index
    %63 = vector.load %arg4[%c1_27, %c0_28, %c0_29] : memref<3x64x64xbf16, #tpu.memory_space<vmem>>, vector<1x64x64xbf16>
    %64 = vector.shape_cast %63 : vector<1x64x64xbf16> to vector<64x64xbf16>
    %cst_30 = arith.constant dense<0.000000e+00> : vector<32x64xf32>
    %65 = tpu.matmul %62, %64, %cst_30 {dimension_numbers = #tpu.dot_dimension_numbers<[1], [0], [0], [1], [0, 0, 1, 1], [], []>} : vector<32x64xbf16>, vector<64x64xbf16>, vector<32x64xf32> -> vector<32x64xf32>
    %66 = arith.addf %60, %65 : vector<32x64xf32>
    %67 = vector.extract_strided_slice %53 {offsets = [0, 2, 0], sizes = [4, 8, 64], strides = [1, 1, 1]} : vector<4x10x64xbf16> to vector<4x8x64xbf16>
    %68 = vector.shape_cast %67 : vector<4x8x64xbf16> to vector<32x64xbf16>
    %c2_31 = arith.constant 2 : index
    %c0_32 = arith.constant 0 : index
    %c0_33 = arith.constant 0 : index
    %69 = vector.load %arg4[%c2_31, %c0_32, %c0_33] : memref<3x64x64xbf16, #tpu.memory_space<vmem>>, vector<1x64x64xbf16>
    %70 = vector.shape_cast %69 : vector<1x64x64xbf16> to vector<64x64xbf16>
    %cst_34 = arith.constant dense<0.000000e+00> : vector<32x64xf32>
    %71 = tpu.matmul %68, %70, %cst_34 {dimension_numbers = #tpu.dot_dimension_numbers<[1], [0], [0], [1], [0, 0, 1, 1], [], []>} : vector<32x64xbf16>, vector<64x64xbf16>, vector<32x64xf32> -> vector<32x64xf32>
    %72 = arith.addf %66, %71 : vector<32x64xf32>
    %73 = arith.addf %72, %44 : vector<32x64xf32>
    %cst_35 = arith.constant 0.000000e+00 : f32
    %74 = vector.broadcast %cst_35 : f32 to vector<32x64xf32>
    %75 = arith.maximumf %73, %74 : vector<32x64xf32>
    %76 = vector.shape_cast %75 : vector<32x64xf32> to vector<4x8x64xf32>
    %77 = tpu.concatenate %41, %76, %41 in 1 : vector<4x1x64xf32>, vector<4x8x64xf32>, vector<4x1x64xf32> -> vector<4x10x64xf32>
    %78 = arith.truncf %77 : vector<4x10x64xf32> to vector<4x10x64xbf16>
    %cst_36 = arith.constant 0.000000e+00 : f32
    %79 = vector.broadcast %cst_36 : f32 to vector<32x64xf32>
    %80 = vector.extract_strided_slice %78 {offsets = [0, 0, 0], sizes = [4, 8, 64], strides = [1, 1, 1]} : vector<4x10x64xbf16> to vector<4x8x64xbf16>
    %81 = vector.shape_cast %80 : vector<4x8x64xbf16> to vector<32x64xbf16>
    %c0_37 = arith.constant 0 : index
    %c0_38 = arith.constant 0 : index
    %c0_39 = arith.constant 0 : index
    %82 = vector.load %arg6[%c0_37, %c0_38, %c0_39] : memref<3x64x64xbf16, #tpu.memory_space<vmem>>, vector<1x64x64xbf16>
    %83 = vector.shape_cast %82 : vector<1x64x64xbf16> to vector<64x64xbf16>
    %cst_40 = arith.constant dense<0.000000e+00> : vector<32x64xf32>
    %84 = tpu.matmul %81, %83, %cst_40 {dimension_numbers = #tpu.dot_dimension_numbers<[1], [0], [0], [1], [0, 0, 1, 1], [], []>} : vector<32x64xbf16>, vector<64x64xbf16>, vector<32x64xf32> -> vector<32x64xf32>
    %85 = arith.addf %79, %84 : vector<32x64xf32>
    %86 = vector.extract_strided_slice %78 {offsets = [0, 1, 0], sizes = [4, 8, 64], strides = [1, 1, 1]} : vector<4x10x64xbf16> to vector<4x8x64xbf16>
    %87 = vector.shape_cast %86 : vector<4x8x64xbf16> to vector<32x64xbf16>
    %c1_41 = arith.constant 1 : index
    %c0_42 = arith.constant 0 : index
    %c0_43 = arith.constant 0 : index
    %88 = vector.load %arg6[%c1_41, %c0_42, %c0_43] : memref<3x64x64xbf16, #tpu.memory_space<vmem>>, vector<1x64x64xbf16>
    %89 = vector.shape_cast %88 : vector<1x64x64xbf16> to vector<64x64xbf16>
    %cst_44 = arith.constant dense<0.000000e+00> : vector<32x64xf32>
    %90 = tpu.matmul %87, %89, %cst_44 {dimension_numbers = #tpu.dot_dimension_numbers<[1], [0], [0], [1], [0, 0, 1, 1], [], []>} : vector<32x64xbf16>, vector<64x64xbf16>, vector<32x64xf32> -> vector<32x64xf32>
    %91 = arith.addf %85, %90 : vector<32x64xf32>
    %92 = vector.extract_strided_slice %78 {offsets = [0, 2, 0], sizes = [4, 8, 64], strides = [1, 1, 1]} : vector<4x10x64xbf16> to vector<4x8x64xbf16>
    %93 = vector.shape_cast %92 : vector<4x8x64xbf16> to vector<32x64xbf16>
    %c2_45 = arith.constant 2 : index
    %c0_46 = arith.constant 0 : index
    %c0_47 = arith.constant 0 : index
    %94 = vector.load %arg6[%c2_45, %c0_46, %c0_47] : memref<3x64x64xbf16, #tpu.memory_space<vmem>>, vector<1x64x64xbf16>
    %95 = vector.shape_cast %94 : vector<1x64x64xbf16> to vector<64x64xbf16>
    %cst_48 = arith.constant dense<0.000000e+00> : vector<32x64xf32>
    %96 = tpu.matmul %93, %95, %cst_48 {dimension_numbers = #tpu.dot_dimension_numbers<[1], [0], [0], [1], [0, 0, 1, 1], [], []>} : vector<32x64xbf16>, vector<64x64xbf16>, vector<32x64xf32> -> vector<32x64xf32>
    %97 = arith.addf %91, %96 : vector<32x64xf32>
    %98 = arith.addf %50, %97 : vector<32x64xf32>
    %99 = arith.addf %98, %47 : vector<32x64xf32>
    %cst_49 = arith.constant 0.000000e+00 : f32
    %100 = vector.broadcast %cst_49 : f32 to vector<32x64xf32>
    %101 = arith.maximumf %99, %100 : vector<32x64xf32>
    %102 = vector.shape_cast %101 : vector<32x64xf32> to vector<4x8x64xf32>
    %103 = tpu.concatenate %41, %102, %41 in 1 : vector<4x1x64xf32>, vector<4x8x64xf32>, vector<4x1x64xf32> -> vector<4x10x64xf32>
    %104 = arith.truncf %103 : vector<4x10x64xf32> to vector<4x10x64xbf16>
    %cst_50 = arith.constant 0.000000e+00 : f32
    %105 = vector.broadcast %cst_50 : f32 to vector<32x64xf32>
    %106 = vector.extract_strided_slice %104 {offsets = [0, 0, 0], sizes = [4, 8, 64], strides = [1, 1, 1]} : vector<4x10x64xbf16> to vector<4x8x64xbf16>
    %107 = vector.shape_cast %106 : vector<4x8x64xbf16> to vector<32x64xbf16>
    %c0_51 = arith.constant 0 : index
    %c0_52 = arith.constant 0 : index
    %c0_53 = arith.constant 0 : index
    %108 = vector.load %arg4[%c0_51, %c0_52, %c0_53] : memref<3x64x64xbf16, #tpu.memory_space<vmem>>, vector<1x64x64xbf16>
    %109 = vector.shape_cast %108 : vector<1x64x64xbf16> to vector<64x64xbf16>
    %cst_54 = arith.constant dense<0.000000e+00> : vector<32x64xf32>
    %110 = tpu.matmul %107, %109, %cst_54 {dimension_numbers = #tpu.dot_dimension_numbers<[1], [0], [0], [1], [0, 0, 1, 1], [], []>} : vector<32x64xbf16>, vector<64x64xbf16>, vector<32x64xf32> -> vector<32x64xf32>
    %111 = arith.addf %105, %110 : vector<32x64xf32>
    %112 = vector.extract_strided_slice %104 {offsets = [0, 1, 0], sizes = [4, 8, 64], strides = [1, 1, 1]} : vector<4x10x64xbf16> to vector<4x8x64xbf16>
    %113 = vector.shape_cast %112 : vector<4x8x64xbf16> to vector<32x64xbf16>
    %c1_55 = arith.constant 1 : index
    %c0_56 = arith.constant 0 : index
    %c0_57 = arith.constant 0 : index
    %114 = vector.load %arg4[%c1_55, %c0_56, %c0_57] : memref<3x64x64xbf16, #tpu.memory_space<vmem>>, vector<1x64x64xbf16>
    %115 = vector.shape_cast %114 : vector<1x64x64xbf16> to vector<64x64xbf16>
    %cst_58 = arith.constant dense<0.000000e+00> : vector<32x64xf32>
    %116 = tpu.matmul %113, %115, %cst_58 {dimension_numbers = #tpu.dot_dimension_numbers<[1], [0], [0], [1], [0, 0, 1, 1], [], []>} : vector<32x64xbf16>, vector<64x64xbf16>, vector<32x64xf32> -> vector<32x64xf32>
    %117 = arith.addf %111, %116 : vector<32x64xf32>
    %118 = vector.extract_strided_slice %104 {offsets = [0, 2, 0], sizes = [4, 8, 64], strides = [1, 1, 1]} : vector<4x10x64xbf16> to vector<4x8x64xbf16>
    %119 = vector.shape_cast %118 : vector<4x8x64xbf16> to vector<32x64xbf16>
    %c2_59 = arith.constant 2 : index
    %c0_60 = arith.constant 0 : index
    %c0_61 = arith.constant 0 : index
    %120 = vector.load %arg4[%c2_59, %c0_60, %c0_61] : memref<3x64x64xbf16, #tpu.memory_space<vmem>>, vector<1x64x64xbf16>
    %121 = vector.shape_cast %120 : vector<1x64x64xbf16> to vector<64x64xbf16>
    %cst_62 = arith.constant dense<0.000000e+00> : vector<32x64xf32>
    %122 = tpu.matmul %119, %121, %cst_62 {dimension_numbers = #tpu.dot_dimension_numbers<[1], [0], [0], [1], [0, 0, 1, 1], [], []>} : vector<32x64xbf16>, vector<64x64xbf16>, vector<32x64xf32> -> vector<32x64xf32>
    %123 = arith.addf %117, %122 : vector<32x64xf32>
    %124 = arith.addf %123, %44 : vector<32x64xf32>
    %cst_63 = arith.constant 0.000000e+00 : f32
    %125 = vector.broadcast %cst_63 : f32 to vector<32x64xf32>
    %126 = arith.maximumf %124, %125 : vector<32x64xf32>
    %127 = vector.shape_cast %126 : vector<32x64xf32> to vector<4x8x64xf32>
    %128 = tpu.concatenate %41, %127, %41 in 1 : vector<4x1x64xf32>, vector<4x8x64xf32>, vector<4x1x64xf32> -> vector<4x10x64xf32>
    %129 = arith.truncf %128 : vector<4x10x64xf32> to vector<4x10x64xbf16>
    %cst_64 = arith.constant 0.000000e+00 : f32
    %130 = vector.broadcast %cst_64 : f32 to vector<32x64xf32>
    %131 = vector.extract_strided_slice %129 {offsets = [0, 0, 0], sizes = [4, 8, 64], strides = [1, 1, 1]} : vector<4x10x64xbf16> to vector<4x8x64xbf16>
    %132 = vector.shape_cast %131 : vector<4x8x64xbf16> to vector<32x64xbf16>
    %c0_65 = arith.constant 0 : index
    %c0_66 = arith.constant 0 : index
    %c0_67 = arith.constant 0 : index
    %133 = vector.load %arg6[%c0_65, %c0_66, %c0_67] : memref<3x64x64xbf16, #tpu.memory_space<vmem>>, vector<1x64x64xbf16>
    %134 = vector.shape_cast %133 : vector<1x64x64xbf16> to vector<64x64xbf16>
    %cst_68 = arith.constant dense<0.000000e+00> : vector<32x64xf32>
    %135 = tpu.matmul %132, %134, %cst_68 {dimension_numbers = #tpu.dot_dimension_numbers<[1], [0], [0], [1], [0, 0, 1, 1], [], []>} : vector<32x64xbf16>, vector<64x64xbf16>, vector<32x64xf32> -> vector<32x64xf32>
    %136 = arith.addf %130, %135 : vector<32x64xf32>
    %137 = vector.extract_strided_slice %129 {offsets = [0, 1, 0], sizes = [4, 8, 64], strides = [1, 1, 1]} : vector<4x10x64xbf16> to vector<4x8x64xbf16>
    %138 = vector.shape_cast %137 : vector<4x8x64xbf16> to vector<32x64xbf16>
    %c1_69 = arith.constant 1 : index
    %c0_70 = arith.constant 0 : index
    %c0_71 = arith.constant 0 : index
    %139 = vector.load %arg6[%c1_69, %c0_70, %c0_71] : memref<3x64x64xbf16, #tpu.memory_space<vmem>>, vector<1x64x64xbf16>
    %140 = vector.shape_cast %139 : vector<1x64x64xbf16> to vector<64x64xbf16>
    %cst_72 = arith.constant dense<0.000000e+00> : vector<32x64xf32>
    %141 = tpu.matmul %138, %140, %cst_72 {dimension_numbers = #tpu.dot_dimension_numbers<[1], [0], [0], [1], [0, 0, 1, 1], [], []>} : vector<32x64xbf16>, vector<64x64xbf16>, vector<32x64xf32> -> vector<32x64xf32>
    %142 = arith.addf %136, %141 : vector<32x64xf32>
    %143 = vector.extract_strided_slice %129 {offsets = [0, 2, 0], sizes = [4, 8, 64], strides = [1, 1, 1]} : vector<4x10x64xbf16> to vector<4x8x64xbf16>
    %144 = vector.shape_cast %143 : vector<4x8x64xbf16> to vector<32x64xbf16>
    %c2_73 = arith.constant 2 : index
    %c0_74 = arith.constant 0 : index
    %c0_75 = arith.constant 0 : index
    %145 = vector.load %arg6[%c2_73, %c0_74, %c0_75] : memref<3x64x64xbf16, #tpu.memory_space<vmem>>, vector<1x64x64xbf16>
    %146 = vector.shape_cast %145 : vector<1x64x64xbf16> to vector<64x64xbf16>
    %cst_76 = arith.constant dense<0.000000e+00> : vector<32x64xf32>
    %147 = tpu.matmul %144, %146, %cst_76 {dimension_numbers = #tpu.dot_dimension_numbers<[1], [0], [0], [1], [0, 0, 1, 1], [], []>} : vector<32x64xbf16>, vector<64x64xbf16>, vector<32x64xf32> -> vector<32x64xf32>
    %148 = arith.addf %142, %147 : vector<32x64xf32>
    %149 = arith.addf %101, %148 : vector<32x64xf32>
    %150 = arith.addf %149, %47 : vector<32x64xf32>
    %151 = vector.shape_cast %150 : vector<32x64xf32> to vector<4x8x64xf32>
    %c0_77 = arith.constant 0 : index
    %c0_78 = arith.constant 0 : index
    %c0_79 = arith.constant 0 : index
    %152 = vector.load %arg8[%c0_77, %c0_78, %c0_79] : memref<4x8x64xf32, #tpu.memory_space<vmem>>, vector<4x8x64xf32>
    tpu.vector_store %arg8[%c0_77, %c0_78, %c0_79], %151 {strides = array<i32>} : memref<4x8x64xf32, #tpu.memory_space<vmem>>, vector<4x8x64xf32>,
    return
  }
  func.func @transform_0(%arg0: i32) -> (i32, i32, i32) {
    %c0_i32 = arith.constant 0 : i32
    %c0_i32_0 = arith.constant 0 : i32
    %c0_i32_1 = arith.constant 0 : i32
    return %arg0, %c0_i32, %c0_i32_0 : i32, i32, i32
  }
  func.func @transform_1(%arg0: i32) -> (i32, i32, i32) {
    %c0_i32 = arith.constant 0 : i32
    %c0_i32_0 = arith.constant 0 : i32
    %c0_i32_1 = arith.constant 0 : i32
    %c0_i32_2 = arith.constant 0 : i32
    return %c0_i32, %c0_i32_0, %c0_i32_1 : i32, i32, i32
  }
  func.func @transform_2(%arg0: i32) -> (i32, i32) {
    %c0_i32 = arith.constant 0 : i32
    %c0_i32_0 = arith.constant 0 : i32
    %c0_i32_1 = arith.constant 0 : i32
    return %c0_i32, %c0_i32_0 : i32, i32
  }
  func.func @transform_3(%arg0: i32) -> (i32, i32, i32) {
    %c0_i32 = arith.constant 0 : i32
    %c0_i32_0 = arith.constant 0 : i32
    %c0_i32_1 = arith.constant 0 : i32
    %c0_i32_2 = arith.constant 0 : i32
    return %c0_i32, %c0_i32_0, %c0_i32_1 : i32, i32, i32
  }
  func.func @transform_4(%arg0: i32) -> (i32, i32) {
    %c0_i32 = arith.constant 0 : i32
    %c0_i32_0 = arith.constant 0 : i32
    %c0_i32_1 = arith.constant 0 : i32
    return %c0_i32, %c0_i32_0 : i32, i32
  }
  func.func @transform_5(%arg0: i32) -> (i32, i32, i32) {
    %c0_i32 = arith.constant 0 : i32
    %c0_i32_0 = arith.constant 0 : i32
    %c0_i32_1 = arith.constant 0 : i32
    %c0_i32_2 = arith.constant 0 : i32
    return %c0_i32, %c0_i32_0, %c0_i32_1 : i32, i32, i32
  }
  func.func @transform_6(%arg0: i32) -> (i32, i32) {
    %c0_i32 = arith.constant 0 : i32
    %c0_i32_0 = arith.constant 0 : i32
    %c0_i32_1 = arith.constant 0 : i32
    return %c0_i32, %c0_i32_0 : i32, i32
  }
  func.func @transform_7(%arg0: i32) -> (i32, i32, i32) {
    %c0_i32 = arith.constant 0 : i32
    %c0_i32_0 = arith.constant 0 : i32
    %c0_i32_1 = arith.constant 0 : i32
    return %arg0, %c0_i32, %c0_i32_0 : i32, i32, i32
  }
}

</mosaic_0001>

<llo_original>
// kernel: tile.18
$region0: #{tile.18}
  #allocation0 [shape = 's32[1]{0}', space=sflag, size = 0x4, scoped, tag = 'scoped memory for tile.18']
  %s0 = inlined_call_operand.vmem [shape: f32[8], index: 0, kind: input, shape index: {}]
  %s1 = inlined_call_operand.vmem [shape: f32[24,8], index: 1, kind: output, shape index: {}]
  // Predicated region
  $region2: #{tile.18} parent=0 // pred_check
    _
  $region3: #{tile.18} parent=0 // pred_check_branch
    %3 = sbr.rel (0) target = $region5
  $region4: #{tile.18} parent=0 // pred_region
    _
  $region5: #{tile.18} parent=0 // pred_fallthru
    _
  %v4 = vld [vmem:[%s0] ss:$0 sm:$0xff]
  %5 = vst [vmem:[%s1] sm:$0xff] %v4
  %s6 = scalar_lea.vmem %s1, 8
  %7 = vst [vmem:[%s6] sm:$0xff] %v4
  %s8 = scalar_lea.vmem %s1, 16
  %9 = vst [vmem:[%s8] sm:$0xff] %v4

// kernel: tile.23
$region0: #{tile.23}
  #allocation0 [shape = 's32[1]{0}', space=sflag, size = 0x4, scoped, tag = 'scoped memory for tile.23']
  %s0 = inlined_call_operand.vmem [shape: f32[8], index: 0, kind: input, shape index: {}]
  %s1 = inlined_call_operand.vmem [shape: f32[8,8], index: 1, kind: output, shape index: {}]
  // Predicated region
  $region2: #{tile.23} parent=0 // pred_check
    _
  $region3: #{tile.23} parent=0 // pred_check_branch
    %3 = sbr.rel (0) target = $region5
  $region4: #{tile.23} parent=0 // pred_region
    _
  $region5: #{tile.23} parent=0 // pred_fallthru
    _
  %v4 = vld [vmem:[%s0] ss:$0 sm:$0xff]
  %5 = vst [vmem:[%s1] sm:$0xff] %v4

// kernel: tile.24
$region0: #{tile.24}
  %s0 = inlined_call_operand.vmem [shape: f32[8,8], index: 0, kind: input, shape index: {}]
  %s1 = inlined_call_operand.vmem [shape: f32[1,64], index: 1, kind: output, shape index: {}]
  $region1: #{tile.24} parent=0
    #allocation0 [shape = 'u8[4096]{0}', space=vmem, size = 0x1000, scoped, tag = 'scoped mem for output reshape']
    %v2 = vld [vmem:[%s0] sm:$0x1]
    %vm3 = vcmask 64512
    %4 = vst.msk [vmem:[#allocation0] sm:$0x1] %vm3, %v2
    %s5 = scalar_lea.vmem %s0, 7
    %v6 = vld [vmem:[%s5] sm:$0x1]
    %7 = vrot.lane.b32.xlu0 %v6, 56
    %v8 = vpop.permute.xlu0 %7
    %vm9 = vcmask 523712
    %10 = vst.msk [vmem:[#allocation0] sm:$0x1] %vm9, %v8
    %s11 = scalar_lea.vmem %s0, 6
    %v12 = vld [vmem:[%s11] sm:$0x1]
    %13 = vrot.lane.b32.xlu0 %v12, 48
    %v14 = vpop.permute.xlu0 %13
    %vm15 = vcmask 458112
    %16 = vst.msk [vmem:[#allocation0] sm:$0x1] %vm15, %v14
    %s17 = scalar_lea.vmem %s0, 5
    %v18 = vld [vmem:[%s17] sm:$0x1]
    %19 = vrot.lane.b32.xlu0 %v18, 40
    %v20 = vpop.permute.xlu0 %19
    %vm21 = vcmask 392512
    %22 = vst.msk [vmem:[#allocation0] sm:$0x1] %vm21, %v20
    %s23 = scalar_lea.vmem %s0, 4
    %v24 = vld [vmem:[%s23] sm:$0x1]
    %25 = vrot.lane.b32.xlu0 %v24, 32
    %v26 = vpop.permute.xlu0 %25
    %vm27 = vcmask 326912
    %28 = vst.msk [vmem:[#allocation0] sm:$0x1] %vm27, %v26
    %s29 = scalar_lea.vmem %s0, 3
    %v30 = vld [vmem:[%s29] sm:$0x1]
    %31 = vrot.lane.b32.xlu0 %v30, 24
    %v32 = vpop.permute.xlu0 %31
    %vm33 = vcmask 261312
    %34 = vst.msk [vmem:[#allocation0] sm:$0x1] %vm33, %v32
    %s35 = scalar_lea.vmem %s0, 2
    %v36 = vld [vmem:[%s35] sm:$0x1]
    %37 = vrot.lane.b32.xlu0 %v36, 16
    %v38 = vpop.permute.xlu0 %37
    %vm39 = vcmask 195712
    %40 = vst.msk [vmem:[#allocation0] sm:$0x1] %vm39, %v38
    %s41 = scalar_lea.vmem %s0, 1
    %v42 = vld [vmem:[%s41] sm:$0x1]
    %43 = vrot.lane.b32.xlu0 %v42, 8
    %v44 = vpop.permute.xlu0 %43
    %vm45 = vcmask 130112
    %46 = vst.msk [vmem:[#allocation0] sm:$0x1] %vm45, %v44
    %s48 = ssub.s32 2, 1
    %v49 = vld [vmem:[#allocation0] sm:%s48]
    %s51 = ssub.s32 2, 1
    %52 = vst [vmem:[%s1] sm:%s51] %v49

// kernel: convnet_block_forward.1
$region0: #{convnet_block_forward.1}
  #allocation0 [shape = 'u32[]', space=smem, size = 0x4, offset = 0x4, fixed_abs, tag = 'smem constant byte address 0x4 - core index']
  #allocation1 [shape = 'u32[72,128]{1,0:T(1,128)}', space=vmem, size = 0x9000, scoped, tag = 'internal scratch']
  %s0 = inlined_call_operand.vmem [shape: f32[4,16,64], index: 0, kind: input, shape index: {}]
  %s1 = inlined_call_operand.vmem [shape: bf16[3,64,192], index: 1, kind: input, shape index: {}]
  %s2 = inlined_call_operand.vmem [shape: f32[1,192], index: 2, kind: input, shape index: {}]
  %s3 = inlined_call_operand.vmem [shape: bf16[3,64,64], index: 3, kind: input, shape index: {}]
  %s4 = inlined_call_operand.vmem [shape: f32[1,64], index: 4, kind: input, shape index: {}]
  %s5 = inlined_call_operand.vmem [shape: bf16[3,64,64], index: 5, kind: input, shape index: {}]
  %s6 = inlined_call_operand.vmem [shape: f32[1,64], index: 6, kind: input, shape index: {}]
  %s7 = inlined_call_operand.vmem [shape: f32[4,8,64], index: 7, kind: output, shape index: {}]
  %s8 = sld [smem:[#allocation0]]
  $region38: #{convnet_block_forward.1} parent=0
    _
  %s10 = ssub.s32 1, %s8
  %s11 = scalar_select 0, %s10, %s8
  // Predicated region
  $region2: #{convnet_block_forward.1} parent=0 // pred_check
    _
  $region3: #{convnet_block_forward.1} parent=0 // pred_check_branch
    %13 = sbr.rel (0) target = $region5
  $region4: #{convnet_block_forward.1} parent=0 // pred_region
    _
  $region5: #{convnet_block_forward.1} parent=0 // pred_fallthru
    _
  // Predicated region
  $region6: #{convnet_block_forward.1} parent=0 // pred_check
    _
  $region7: #{convnet_block_forward.1} parent=0 // pred_check_branch
    %15 = sbr.rel (0) target = $region9
  $region8: #{convnet_block_forward.1} parent=0 // pred_region
    _
  $region9: #{convnet_block_forward.1} parent=0 // pred_fallthru
    _
  // Predicated region
  $region10: #{convnet_block_forward.1} parent=0 // pred_check
    _
  $region11: #{convnet_block_forward.1} parent=0 // pred_check_branch
    %17 = sbr.rel (0) target = $region13
  $region12: #{convnet_block_forward.1} parent=0 // pred_region
    _
  $region13: #{convnet_block_forward.1} parent=0 // pred_fallthru
    _
  // Predicated region
  $region14: #{convnet_block_forward.1} parent=0 // pred_check
    _
  $region15: #{convnet_block_forward.1} parent=0 // pred_check_branch
    %19 = sbr.rel (0) target = $region17
  $region16: #{convnet_block_forward.1} parent=0 // pred_region
    _
  $region17: #{convnet_block_forward.1} parent=0 // pred_fallthru
    _
  // Predicated region
  $region18: #{convnet_block_forward.1} parent=0 // pred_check
    _
  $region19: #{convnet_block_forward.1} parent=0 // pred_check_branch
    %21 = sbr.rel (0) target = $region21
  $region20: #{convnet_block_forward.1} parent=0 // pred_region
    _
  $region21: #{convnet_block_forward.1} parent=0 // pred_fallthru
    _
  // Predicated region
  $region22: #{convnet_block_forward.1} parent=0 // pred_check
    _
  $region23: #{convnet_block_forward.1} parent=0 // pred_check_branch
    %23 = sbr.rel (0) target = $region25
  $region24: #{convnet_block_forward.1} parent=0 // pred_region
    _
  $region25: #{convnet_block_forward.1} parent=0 // pred_fallthru
    _
  // Predicated region
  $region26: #{convnet_block_forward.1} parent=0 // pred_check
    _
  $region27: #{convnet_block_forward.1} parent=0 // pred_check_branch
    %25 = sbr.rel (0) target = $region29
  $region28: #{convnet_block_forward.1} parent=0 // pred_region
    _
  $region29: #{convnet_block_forward.1} parent=0 // pred_fallthru
    _
  %v27 = vld [vmem:[%s0] sm:$0xff]
  %v28 = vld [vmem:[%s0 + $0x8] sm:$0xff]
  %v29 = vld [vmem:[%s0 + $0x10] sm:$0xff]
  %v30 = vld [vmem:[%s0 + $0x18] sm:$0xff]
  %v31 = vld [vmem:[%s0 + $0x20] sm:$0xff]
  %v32 = vld [vmem:[%s0 + $0x28] sm:$0xff]
  %v33 = vld [vmem:[%s0 + $0x30] sm:$0xff]
  %v34 = vld [vmem:[%s0 + $0x38] sm:$0xff]
  %vm43 = vcmask 1040384
  %v44 = vrot.slane %v27, 7
  %v45 = vrot.slane %v28, 7
  %v46 = vsel %vm43, %v44, %v45
  %v47 = vrot.slane %v29, 7
  %v48 = vrot.slane %v30, 7
  %v49 = vsel %vm43, %v47, %v48
  %v50 = vrot.slane %v31, 7
  %v51 = vrot.slane %v32, 7
  %v52 = vsel %vm43, %v50, %v51
  %v53 = vrot.slane %v33, 7
  %v54 = vrot.slane %v34, 7
  %v55 = vsel %vm43, %v53, %v54
  %v68 = vsel %vm43, 0.0, %v44
  %v69 = vsel %vm43, 0.0, %v47
  %v70 = vsel %vm43, 0.0, %v50
  %v71 = vsel %vm43, 0.0, %v53
  %v72 = vsel %vm43, %v45, 0.0
  %v73 = vsel %vm43, %v48, 0.0
  %v74 = vsel %vm43, %v51, 0.0
  %v75 = vsel %vm43, %v54, 0.0
  %v76 = vpack.c.bf16 %v68, %v68
  %v77 = vpack.c.bf16 %v46, %v46
  %v78 = vpack.c.bf16 %v72, %v72
  %v79 = vpack.c.bf16 %v69, %v69
  %v80 = vpack.c.bf16 %v49, %v49
  %v81 = vpack.c.bf16 %v73, %v73
  %v82 = vpack.c.bf16 %v70, %v70
  %v83 = vpack.c.bf16 %v52, %v52
  %v84 = vpack.c.bf16 %v74, %v74
  %v85 = vpack.c.bf16 %v71, %v71
  %v86 = vpack.c.bf16 %v55, %v55
  %v87 = vpack.c.bf16 %v75, %v75
  %v88 = vld [vmem:[%s1] sm:$0xff]
  %v89 = vld [vmem:[%s1 + $0x8] sm:$0xff]
  %v90 = vld [vmem:[%s1 + $0x10] sm:$0xff]
  %v91 = vld [vmem:[%s1 + $0x18] sm:$0xff]
  %v92 = vld [vmem:[%s1 + $0x20] sm:$0xff]
  %v93 = vld [vmem:[%s1 + $0x28] sm:$0xff]
  %v94 = vld [vmem:[%s1 + $0x30] sm:$0xff]
  %v95 = vld [vmem:[%s1 + $0x38] sm:$0xff]
  %vm96 = vsmask.f32 3328
  %vm97 = vsmask.f32 7440
  %vm98 = vmor %vm96, %vm97
  %v100 = vshrl.u32 %v76, 16
  %v102 = vrot.slane %v100, 4
  %v103 = vshll.u32 %v76, 16
  %v105 = vrot.slane %v103, 5
  %v106 = vor.u32 %v102, %v105
  %v107 = vrot.slane %v106, 4
  %v109 = vshll.u32 %v77, 16
  %v111 = vrot.slane %v109, 5
  %v112 = vsel %vm98, %v107, %v111
  %v113 = vshrl.u32 %v77, 16
  %v115 = vrot.slane %v113, 4
  %v116 = vor.u32 %v115, %v111
  %v117 = vrot.slane %v116, 4
  %v119 = vshll.u32 %v78, 16
  %v121 = vrot.slane %v119, 5
  %v122 = vsel %vm98, %v117, %v121
  %v124 = vshrl.u32 %v79, 16
  %v126 = vrot.slane %v124, 4
  %v127 = vshll.u32 %v79, 16
  %v129 = vrot.slane %v127, 5
  %v130 = vor.u32 %v126, %v129
  %v131 = vrot.slane %v130, 4
  %v133 = vshll.u32 %v80, 16
  %v135 = vrot.slane %v133, 5
  %v136 = vsel %vm98, %v131, %v135
  %v137 = vshrl.u32 %v80, 16
  %v139 = vrot.slane %v137, 4
  %v140 = vor.u32 %v139, %v135
  %v141 = vrot.slane %v140, 4
  %v143 = vshll.u32 %v81, 16
  %v145 = vrot.slane %v143, 5
  %v146 = vsel %vm98, %v141, %v145
  %v148 = vshrl.u32 %v82, 16
  %v150 = vrot.slane %v148, 4
  %v151 = vshll.u32 %v82, 16
  %v153 = vrot.slane %v151, 5
  %v154 = vor.u32 %v150, %v153
  %v155 = vrot.slane %v154, 4
  %v157 = vshll.u32 %v83, 16
  %v159 = vrot.slane %v157, 5
  %v160 = vsel %vm98, %v155, %v159
  %v161 = vshrl.u32 %v83, 16
  %v163 = vrot.slane %v161, 4
  %v164 = vor.u32 %v163, %v159
  %v165 = vrot.slane %v164, 4
  %v167 = vshll.u32 %v84, 16
  %v169 = vrot.slane %v167, 5
  %v170 = vsel %vm98, %v165, %v169
  %v172 = vshrl.u32 %v85, 16
  %v174 = vrot.slane %v172, 4
  %v175 = vshll.u32 %v85, 16
  %v177 = vrot.slane %v175, 5
  %v178 = vor.u32 %v174, %v177
  %v179 = vrot.slane %v178, 4
  %v181 = vshll.u32 %v86, 16
  %v183 = vrot.slane %v181, 5
  %v184 = vsel %vm98, %v179, %v183
  %v185 = vshrl.u32 %v86, 16
  %v187 = vrot.slane %v185, 4
  %v188 = vor.u32 %v187, %v183
  %v189 = vrot.slane %v188, 4
  %v191 = vshll.u32 %v87, 16
  %v193 = vrot.slane %v191, 5
  %v194 = vsel %vm98, %v189, %v193
  %s195 = scalar_lea.vmem %s1, 64
  %v196 = vld [vmem:[%s195] sm:$0xff]
  %v197 = vld [vmem:[%s195 + $0x8] sm:$0xff]
  %v198 = vld [vmem:[%s195 + $0x10] sm:$0xff]
  %v199 = vld [vmem:[%s195 + $0x18] sm:$0xff]
  %v200 = vld [vmem:[%s195 + $0x20] sm:$0xff]
  %v201 = vld [vmem:[%s195 + $0x28] sm:$0xff]
  %v202 = vld [vmem:[%s195 + $0x30] sm:$0xff]
  %v203 = vld [vmem:[%s195 + $0x38] sm:$0xff]
  %v204 = vunpack.c.l.b16 %v112
  %v205 = vunpack.c.l.b16 %v122
  %v206 = vunpack.c.l.b16 %v136
  %v207 = vunpack.c.l.b16 %v146
  %v208 = vunpack.c.l.b16 %v160
  %v209 = vunpack.c.l.b16 %v170
  %v210 = vunpack.c.l.b16 %v184
  %v211 = vunpack.c.l.b16 %v194
  %v212 = vpack.c.b16 %v205, %v204
  %v213 = vpack.c.b16 %v207, %v206
  %v214 = vpack.c.b16 %v209, %v208
  %v215 = vpack.c.b16 %v211, %v210
  %v224 = vunpack.c.l.b16 %v196
  %v225 = vunpack.c.h.b16 %v196
  %v226 = vunpack.c.l.b16 %v197
  %v227 = vunpack.c.h.b16 %v197
  %v228 = vunpack.c.l.b16 %v198
  %v229 = vunpack.c.h.b16 %v198
  %v230 = vunpack.c.l.b16 %v199
  %v231 = vunpack.c.h.b16 %v199
  %v232 = vunpack.c.l.b16 %v200
  %v233 = vunpack.c.h.b16 %v200
  %v234 = vunpack.c.l.b16 %v201
  %v235 = vunpack.c.h.b16 %v201
  %v236 = vunpack.c.l.b16 %v202
  %v237 = vunpack.c.h.b16 %v202
  %v238 = vunpack.c.l.b16 %v203
  %v239 = vunpack.c.h.b16 %v203
  %v240 = vpack.c.b16 %v226, %v224
  %v241 = vpack.c.b16 %v227, %v225
  %v242 = vpack.c.b16 %v230, %v228
  %v243 = vpack.c.b16 %v231, %v229
  %v244 = vpack.c.b16 %v234, %v232
  %v245 = vpack.c.b16 %v235, %v233
  %v246 = vpack.c.b16 %v238, %v236
  %v247 = vpack.c.b16 %v239, %v237
  %vm256 = vcmask 523264
  %v258 = vsel %vm256, %v212, 0
  %v261 = vsel %vm256, %v213, 0
  %v264 = vsel %vm256, %v214, 0
  %v267 = vsel %vm256, %v215, 0
  %269 = vmatpush.bf16.msra.mxu0 0
  %270 = vmatpush.bf16.msra.mxu0 0
  %271 = vmatpush.bf16.msra.mxu0 0
  %272 = vmatpush.bf16.msra.mxu0 0
  %273 = vmatpush.bf16.msra.mxu0 %v246
  %274 = vmatpush.bf16.msra.mxu0 %v244
  %275 = vmatpush.bf16.msra.mxu0 %v242
  %276 = vmatpush.bf16.msra.mxu0 %v240
  %277 = vmatmul.bf16.gmra.mxu0 %v258
  %v278 = vpop.f32.mrf.mxu0
  %v279 = vadd.f32 0.0, %v278
  %v280 = vpop.f32.mrf.mxu0
  %v281 = vadd.f32 0.0, %v280
  %282 = vmatmul.bf16.gmra.mxu0 %v261
  %v283 = vpop.f32.mrf.mxu0
  %v284 = vadd.f32 0.0, %v283
  %v285 = vpop.f32.mrf.mxu0
  %v286 = vadd.f32 0.0, %v285
  %287 = vmatmul.bf16.gmra.mxu0 %v264
  %v288 = vpop.f32.mrf.mxu0
  %v289 = vadd.f32 0.0, %v288
  %v290 = vpop.f32.mrf.mxu0
  %v291 = vadd.f32 0.0, %v290
  %292 = vmatmul.bf16.gmra.mxu0 %v267
  %v293 = vpop.f32.mrf.mxu0
  %v294 = vadd.f32 0.0, %v293
  %v295 = vpop.f32.mrf.mxu0
  %v296 = vadd.f32 0.0, %v295
  %297 = vdwg.mxu0
  %298 = vmatpush.bf16.msra.mxu0 0
  %299 = vmatpush.bf16.msra.mxu0 0
  %300 = vmatpush.bf16.msra.mxu0 0
  %301 = vmatpush.bf16.msra.mxu0 0
  %302 = vmatpush.bf16.msra.mxu0 %v247
  %303 = vmatpush.bf16.msra.mxu0 %v245
  %304 = vmatpush.bf16.msra.mxu0 %v243
  %305 = vmatpush.bf16.msra.mxu0 %v241
  %306 = vmatmul.bf16.gmra.mxu0 %v258
  %v307 = vpop.f32.mrf.mxu0
  %v308 = vadd.f32 0.0, %v307
  %v309 = vpop.f32.mrf.mxu0
  %v310 = vadd.f32 0.0, %v309
  %311 = vmatmul.bf16.gmra.mxu0 %v261
  %v312 = vpop.f32.mrf.mxu0
  %v313 = vadd.f32 0.0, %v312
  %v314 = vpop.f32.mrf.mxu0
  %v315 = vadd.f32 0.0, %v314
  %316 = vmatmul.bf16.gmra.mxu0 %v264
  %v317 = vpop.f32.mrf.mxu0
  %v318 = vadd.f32 0.0, %v317
  %v319 = vpop.f32.mrf.mxu0
  %v320 = vadd.f32 0.0, %v319
  %321 = vmatmul.bf16.gmra.mxu0 %v267
  %v322 = vpop.f32.mrf.mxu0
  %v323 = vadd.f32 0.0, %v322
  %v324 = vpop.f32.mrf.mxu0
  %v325 = vadd.f32 0.0, %v324
  %326 = vdwg.mxu0
  %v335 = vunpack.c.l.b16 %v76
  %v336 = vunpack.c.l.b16 %v77
  %v337 = vunpack.c.l.b16 %v79
  %v338 = vunpack.c.l.b16 %v80
  %v339 = vunpack.c.l.b16 %v82
  %v340 = vunpack.c.l.b16 %v83
  %v341 = vunpack.c.l.b16 %v85
  %v342 = vunpack.c.l.b16 %v86
  %v343 = vpack.c.b16 %v336, %v335
  %v344 = vpack.c.b16 %v338, %v337
  %v345 = vpack.c.b16 %v340, %v339
  %v346 = vpack.c.b16 %v342, %v341
  %v355 = vunpack.c.l.b16 %v88
  %v356 = vunpack.c.h.b16 %v88
  %v357 = vunpack.c.l.b16 %v89
  %v358 = vunpack.c.h.b16 %v89
  %v359 = vunpack.c.l.b16 %v90
  %v360 = vunpack.c.h.b16 %v90
  %v361 = vunpack.c.l.b16 %v91
  %v362 = vunpack.c.h.b16 %v91
  %v363 = vunpack.c.l.b16 %v92
  %v364 = vunpack.c.h.b16 %v92
  %v365 = vunpack.c.l.b16 %v93
  %v366 = vunpack.c.h.b16 %v93
  %v367 = vunpack.c.l.b16 %v94
  %v368 = vunpack.c.h.b16 %v94
  %v369 = vunpack.c.l.b16 %v95
  %v370 = vunpack.c.h.b16 %v95
  %v371 = vpack.c.b16 %v357, %v355
  %v372 = vpack.c.b16 %v358, %v356
  %v373 = vpack.c.b16 %v361, %v359
  %v374 = vpack.c.b16 %v362, %v360
  %v375 = vpack.c.b16 %v365, %v363
  %v376 = vpack.c.b16 %v366, %v364
  %v377 = vpack.c.b16 %v369, %v367
  %v378 = vpack.c.b16 %v370, %v368
  %v388 = vsel %vm256, %v343, 0
  %v391 = vsel %vm256, %v344, 0
  %v394 = vsel %vm256, %v345, 0
  %v397 = vsel %vm256, %v346, 0
  %399 = vmatpush.bf16.msra.mxu0 0
  %400 = vmatpush.bf16.msra.mxu0 0
  %401 = vmatpush.bf16.msra.mxu0 0
  %402 = vmatpush.bf16.msra.mxu0 0
  %403 = vmatpush.bf16.msra.mxu0 %v377
  %404 = vmatpush.bf16.msra.mxu0 %v375
  %405 = vmatpush.bf16.msra.mxu0 %v373
  %406 = vmatpush.bf16.msra.mxu0 %v371
  %407 = vmatmul.bf16.gmra.mxu0 %v388
  %v408 = vpop.f32.mrf.mxu0
  %v409 = vadd.f32 %v279, %v408
  %v410 = vpop.f32.mrf.mxu0
  %v411 = vadd.f32 %v281, %v410
  %412 = vmatmul.bf16.gmra.mxu0 %v391
  %v413 = vpop.f32.mrf.mxu0
  %v414 = vadd.f32 %v284, %v413
  %v415 = vpop.f32.mrf.mxu0
  %v416 = vadd.f32 %v286, %v415
  %417 = vmatmul.bf16.gmra.mxu0 %v394
  %v418 = vpop.f32.mrf.mxu0
  %v419 = vadd.f32 %v289, %v418
  %v420 = vpop.f32.mrf.mxu0
  %v421 = vadd.f32 %v291, %v420
  %422 = vmatmul.bf16.gmra.mxu0 %v397
  %v423 = vpop.f32.mrf.mxu0
  %v424 = vadd.f32 %v294, %v423
  %v425 = vpop.f32.mrf.mxu0
  %v426 = vadd.f32 %v296, %v425
  %427 = vdwg.mxu0
  %428 = vmatpush.bf16.msra.mxu0 0
  %429 = vmatpush.bf16.msra.mxu0 0
  %430 = vmatpush.bf16.msra.mxu0 0
  %431 = vmatpush.bf16.msra.mxu0 0
  %432 = vmatpush.bf16.msra.mxu0 %v378
  %433 = vmatpush.bf16.msra.mxu0 %v376
  %434 = vmatpush.bf16.msra.mxu0 %v374
  %435 = vmatpush.bf16.msra.mxu0 %v372
  %436 = vmatmul.bf16.gmra.mxu0 %v388
  %v437 = vpop.f32.mrf.mxu0
  %v438 = vadd.f32 %v308, %v437
  %v439 = vpop.f32.mrf.mxu0
  %v440 = vadd.f32 %v310, %v439
  %441 = vmatmul.bf16.gmra.mxu0 %v391
  %v442 = vpop.f32.mrf.mxu0
  %v443 = vadd.f32 %v313, %v442
  %v444 = vpop.f32.mrf.mxu0
  %v445 = vadd.f32 %v315, %v444
  %446 = vmatmul.bf16.gmra.mxu0 %v394
  %v447 = vpop.f32.mrf.mxu0
  %v448 = vadd.f32 %v318, %v447
  %v449 = vpop.f32.mrf.mxu0
  %v450 = vadd.f32 %v320, %v449
  %451 = vmatmul.bf16.gmra.mxu0 %v397
  %v452 = vpop.f32.mrf.mxu0
  %v453 = vadd.f32 %v323, %v452
  %v454 = vpop.f32.mrf.mxu0
  %v455 = vadd.f32 %v325, %v454
  %456 = vdwg.mxu0
  %vm461 = vcmask 1042432
  %vm462 = vcmask 1046532
  %vm463 = vmor %vm461, %vm462
  %v464 = vrot.slane %v76, 5
  %v465 = vrot.slane %v464, 4
  %v466 = vrot.slane %v77, 5
  %v467 = vsel %vm463, %v465, %v466
  %v468 = vrot.slane %v466, 4
  %v469 = vrot.slane %v78, 5
  %v470 = vsel %vm463, %v468, %v469
  %v471 = vrot.slane %v79, 5
  %v472 = vrot.slane %v471, 4
  %v473 = vrot.slane %v80, 5
  %v474 = vsel %vm463, %v472, %v473
  %v475 = vrot.slane %v473, 4
  %v476 = vrot.slane %v81, 5
  %v477 = vsel %vm463, %v475, %v476
  %v478 = vrot.slane %v82, 5
  %v479 = vrot.slane %v478, 4
  %v480 = vrot.slane %v83, 5
  %v481 = vsel %vm463, %v479, %v480
  %v482 = vrot.slane %v480, 4
  %v483 = vrot.slane %v84, 5
  %v484 = vsel %vm463, %v482, %v483
  %v485 = vrot.slane %v85, 5
  %v486 = vrot.slane %v485, 4
  %v487 = vrot.slane %v86, 5
  %v488 = vsel %vm463, %v486, %v487
  %v489 = vrot.slane %v487, 4
  %v490 = vrot.slane %v87, 5
  %v491 = vsel %vm463, %v489, %v490
  %s492 = scalar_lea.vmem %s1, 128
  %v493 = vld [vmem:[%s492] sm:$0xff]
  %v494 = vld [vmem:[%s492 + $0x8] sm:$0xff]
  %v495 = vld [vmem:[%s492 + $0x10] sm:$0xff]
  %v496 = vld [vmem:[%s492 + $0x18] sm:$0xff]
  %v497 = vld [vmem:[%s492 + $0x20] sm:$0xff]
  %v498 = vld [vmem:[%s492 + $0x28] sm:$0xff]
  %v499 = vld [vmem:[%s492 + $0x30] sm:$0xff]
  %v500 = vld [vmem:[%s492 + $0x38] sm:$0xff]
  %v501 = vunpack.c.l.b16 %v467
  %v502 = vunpack.c.l.b16 %v470
  %v503 = vunpack.c.l.b16 %v474
  %v504 = vunpack.c.l.b16 %v477
  %v505 = vunpack.c.l.b16 %v481
  %v506 = vunpack.c.l.b16 %v484
  %v507 = vunpack.c.l.b16 %v488
  %v508 = vunpack.c.l.b16 %v491
  %v509 = vpack.c.b16 %v502, %v501
  %v510 = vpack.c.b16 %v504, %v503
  %v511 = vpack.c.b16 %v506, %v505
  %v512 = vpack.c.b16 %v508, %v507
  %v521 = vunpack.c.l.b16 %v493
  %v522 = vunpack.c.h.b16 %v493
  %v523 = vunpack.c.l.b16 %v494
  %v524 = vunpack.c.h.b16 %v494
  %v525 = vunpack.c.l.b16 %v495
  %v526 = vunpack.c.h.b16 %v495
  %v527 = vunpack.c.l.b16 %v496
  %v528 = vunpack.c.h.b16 %v496
  %v529 = vunpack.c.l.b16 %v497
  %v530 = vunpack.c.h.b16 %v497
  %v531 = vunpack.c.l.b16 %v498
  %v532 = vunpack.c.h.b16 %v498
  %v533 = vunpack.c.l.b16 %v499
  %v534 = vunpack.c.h.b16 %v499
  %v535 = vunpack.c.l.b16 %v500
  %v536 = vunpack.c.h.b16 %v500
  %v537 = vpack.c.b16 %v523, %v521
  %v538 = vpack.c.b16 %v524, %v522
  %v539 = vpack.c.b16 %v527, %v525
  %v540 = vpack.c.b16 %v528, %v526
  %v541 = vpack.c.b16 %v531, %v529
  %v542 = vpack.c.b16 %v532, %v530
  %v543 = vpack.c.b16 %v535, %v533
  %v544 = vpack.c.b16 %v536, %v534
  %v554 = vsel %vm256, %v509, 0
  %v557 = vsel %vm256, %v510, 0
  %v560 = vsel %vm256, %v511, 0
  %v563 = vsel %vm256, %v512, 0
  %565 = vmatpush.bf16.msra.mxu0 0
  %566 = vmatpush.bf16.msra.mxu0 0
  %567 = vmatpush.bf16.msra.mxu0 0
  %568 = vmatpush.bf16.msra.mxu0 0
  %569 = vmatpush.bf16.msra.mxu0 %v543
  %570 = vmatpush.bf16.msra.mxu0 %v541
  %571 = vmatpush.bf16.msra.mxu0 %v539
  %572 = vmatpush.bf16.msra.mxu0 %v537
  %573 = vmatmul.bf16.gmra.mxu0 %v554
  %v574 = vpop.f32.mrf.mxu0
  %v575 = vadd.f32 0.0, %v574
  %v576 = vpop.f32.mrf.mxu0
  %v577 = vadd.f32 0.0, %v576
  %578 = vmatmul.bf16.gmra.mxu0 %v557
  %v579 = vpop.f32.mrf.mxu0
  %v580 = vadd.f32 0.0, %v579
  %v581 = vpop.f32.mrf.mxu0
  %v582 = vadd.f32 0.0, %v581
  %583 = vmatmul.bf16.gmra.mxu0 %v560
  %v584 = vpop.f32.mrf.mxu0
  %v585 = vadd.f32 0.0, %v584
  %v586 = vpop.f32.mrf.mxu0
  %v587 = vadd.f32 0.0, %v586
  %588 = vmatmul.bf16.gmra.mxu0 %v563
  %v589 = vpop.f32.mrf.mxu0
  %v590 = vadd.f32 0.0, %v589
  %v591 = vpop.f32.mrf.mxu0
  %v592 = vadd.f32 0.0, %v591
  %593 = vdwg.mxu0
  %594 = vmatpush.bf16.msra.mxu0 0
  %595 = vmatpush.bf16.msra.mxu0 0
  %596 = vmatpush.bf16.msra.mxu0 0
  %597 = vmatpush.bf16.msra.mxu0 0
  %598 = vmatpush.bf16.msra.mxu0 %v544
  %599 = vmatpush.bf16.msra.mxu0 %v542
  %600 = vmatpush.bf16.msra.mxu0 %v540
  %601 = vmatpush.bf16.msra.mxu0 %v538
  %602 = vmatmul.bf16.gmra.mxu0 %v554
  %v603 = vpop.f32.mrf.mxu0
  %v604 = vadd.f32 0.0, %v603
  %v605 = vpop.f32.mrf.mxu0
  %v606 = vadd.f32 0.0, %v605
  %607 = vmatmul.bf16.gmra.mxu0 %v557
  %v608 = vpop.f32.mrf.mxu0
  %v609 = vadd.f32 0.0, %v608
  %v610 = vpop.f32.mrf.mxu0
  %v611 = vadd.f32 0.0, %v610
  %612 = vmatmul.bf16.gmra.mxu0 %v560
  %v613 = vpop.f32.mrf.mxu0
  %v614 = vadd.f32 0.0, %v613
  %v615 = vpop.f32.mrf.mxu0
  %v616 = vadd.f32 0.0, %v615
  %617 = vmatmul.bf16.gmra.mxu0 %v563
  %v618 = vpop.f32.mrf.mxu0
  %v619 = vadd.f32 0.0, %v618
  %v620 = vpop.f32.mrf.mxu0
  %v621 = vadd.f32 0.0, %v620
  %622 = vdwg.mxu0
  %v623 = vadd.f32 %v409, %v575
  %v624 = vadd.f32 %v438, %v604
  %v625 = vadd.f32 %v411, %v577
  %v626 = vadd.f32 %v440, %v606
  %v627 = vadd.f32 %v414, %v580
  %v628 = vadd.f32 %v443, %v609
  %v629 = vadd.f32 %v416, %v582
  %v630 = vadd.f32 %v445, %v611
  %v631 = vadd.f32 %v419, %v585
  %v632 = vadd.f32 %v448, %v614
  %v633 = vadd.f32 %v421, %v587
  %v634 = vadd.f32 %v450, %v616
  %v635 = vadd.f32 %v424, %v590
  %v636 = vadd.f32 %v453, %v619
  %v637 = vadd.f32 %v426, %v592
  %v638 = vadd.f32 %v455, %v621
  %v639 = vld [vmem:[%s2] sm:$0x3]
  %v641 = vperm.slane %v639, 0
  %v642 = vperm.slane %v639, 1
  %v645 = vadd.f32 %v623, %v641
  %v646 = vadd.f32 %v624, %v642
  %v647 = vadd.f32 %v625, %v641
  %v648 = vadd.f32 %v626, %v642
  %v649 = vadd.f32 %v627, %v641
  %v650 = vadd.f32 %v628, %v642
  %v651 = vadd.f32 %v629, %v641
  %v652 = vadd.f32 %v630, %v642
  %v653 = vadd.f32 %v631, %v641
  %v654 = vadd.f32 %v632, %v642
  %v655 = vadd.f32 %v633, %v641
  %v656 = vadd.f32 %v634, %v642
  %v657 = vadd.f32 %v635, %v641
  %v658 = vadd.f32 %v636, %v642
  %v659 = vadd.f32 %v637, %v641
  %v660 = vadd.f32 %v638, %v642
  %669 = vrot.lane.b32.xlu0 %v645, 64
  %v670 = vpop.permute.xlu0 %669
  %671 = vrot.lane.b32.xlu0 %v647, 64
  %v672 = vpop.permute.xlu0 %671
  %673 = vrot.lane.b32.xlu0 %v649, 64
  %v674 = vpop.permute.xlu0 %673
  %675 = vrot.lane.b32.xlu0 %v651, 64
  %v676 = vpop.permute.xlu0 %675
  %677 = vrot.lane.b32.xlu0 %v653, 64
  %v678 = vpop.permute.xlu0 %677
  %679 = vrot.lane.b32.xlu0 %v655, 64
  %v680 = vpop.permute.xlu0 %679
  %681 = vrot.lane.b32.xlu0 %v657, 64
  %v682 = vpop.permute.xlu0 %681
  %683 = vrot.lane.b32.xlu0 %v659, 64
  %v684 = vpop.permute.xlu0 %683
  %v693 = vmax.f32 %v645, %v670
  %v694 = vmax.f32 %v647, %v672
  %v695 = vmax.f32 %v649, %v674
  %v696 = vmax.f32 %v651, %v676
  %v697 = vmax.f32 %v653, %v678
  %v698 = vmax.f32 %v655, %v680
  %v699 = vmax.f32 %v657, %v682
  %v700 = vmax.f32 %v659, %v684
  %v701 = vmax.f32 %v693, %v646
  %v702 = vmax.f32 %v694, %v648
  %v703 = vmax.f32 %v695, %v650
  %v704 = vmax.f32 %v696, %v652
  %v705 = vmax.f32 %v697, %v654
  %v706 = vmax.f32 %v698, %v656
  %v707 = vmax.f32 %v699, %v658
  %v708 = vmax.f32 %v700, %v660
  %v717 = vrot.slane %v701, 2
  %v718 = vrot.slane %v701, 4
  %v719 = vrot.slane %v701, 6
  %v720 = vrot.slane %v702, 2
  %v721 = vrot.slane %v702, 4
  %v722 = vrot.slane %v702, 6
  %v723 = vrot.slane %v703, 2
  %v724 = vrot.slane %v703, 4
  %v725 = vrot.slane %v703, 6
  %v726 = vrot.slane %v704, 2
  %v727 = vrot.slane %v704, 4
  %v728 = vrot.slane %v704, 6
  %v729 = vrot.slane %v705, 2
  %v730 = vrot.slane %v705, 4
  %v731 = vrot.slane %v705, 6
  %v732 = vrot.slane %v706, 2
  %v733 = vrot.slane %v706, 4
  %v734 = vrot.slane %v706, 6
  %v735 = vrot.slane %v707, 2
  %v736 = vrot.slane %v707, 4
  %v737 = vrot.slane %v707, 6
  %v738 = vrot.slane %v708, 2
  %v739 = vrot.slane %v708, 4
  %v740 = vrot.slane %v708, 6
  %v765 = vperm.slane %v701, 1
  %v766 = vperm.slane %v717, 1
  %v767 = vperm.slane %v718, 1
  %v768 = vperm.slane %v719, 1
  %v769 = vperm.slane %v702, 1
  %v770 = vperm.slane %v720, 1
  %v771 = vperm.slane %v721, 1
  %v772 = vperm.slane %v703, 1
  %v773 = vperm.slane %v723, 1
  %v774 = vperm.slane %v724, 1
  %v775 = vperm.slane %v725, 1
  %v776 = vperm.slane %v704, 1
  %v777 = vperm.slane %v726, 1
  %v778 = vperm.slane %v727, 1
  %v779 = vperm.slane %v705, 1
  %v780 = vperm.slane %v729, 1
  %v781 = vperm.slane %v730, 1
  %v782 = vperm.slane %v731, 1
  %v783 = vperm.slane %v706, 1
  %v784 = vperm.slane %v732, 1
  %v785 = vperm.slane %v733, 1
  %v786 = vperm.slane %v707, 1
  %v787 = vperm.slane %v735, 1
  %v788 = vperm.slane %v736, 1
  %v789 = vperm.slane %v737, 1
  %v790 = vperm.slane %v708, 1
  %v791 = vperm.slane %v738, 1
  %v792 = vperm.slane %v739, 1
  %vm793 = vcmask 1042434
  %v794 = vsel %vm793, %v766, %v765
  %vm795 = vcmask 1043459
  %v796 = vsel %vm795, %v767, %v794
  %vm797 = vcmask 1044484
  %v798 = vsel %vm797, %v768, %v796
  %vm799 = vcmask 1045509
  %v800 = vsel %vm799, %v769, %v798
  %vm801 = vcmask 1046534
  %v802 = vsel %vm801, %v770, %v800
  %vm803 = vcmask 1047559
  %v804 = vsel %vm803, %v771, %v802
  %v805 = vsel %vm793, %v773, %v772
  %v806 = vsel %vm795, %v774, %v805
  %v807 = vsel %vm797, %v775, %v806
  %v808 = vsel %vm799, %v776, %v807
  %v809 = vsel %vm801, %v777, %v808
  %v810 = vsel %vm803, %v778, %v809
  %v811 = vsel %vm793, %v780, %v779
  %v812 = vsel %vm795, %v781, %v811
  %v813 = vsel %vm797, %v782, %v812
  %v814 = vsel %vm799, %v783, %v813
  %v815 = vsel %vm801, %v784, %v814
  %v816 = vsel %vm803, %v785, %v815
  %v817 = vsel %vm793, %v787, %v786
  %v818 = vsel %vm795, %v788, %v817
  %v819 = vsel %vm797, %v789, %v818
  %v820 = vsel %vm799, %v790, %v819
  %v821 = vsel %vm801, %v791, %v820
  %v822 = vsel %vm803, %v792, %v821
  %v827 = vsel %vm43, -1e+30, %v804
  %v828 = vsel %vm43, -1e+30, %v810
  %v829 = vsel %vm43, -1e+30, %v816
  %v830 = vsel %vm43, -1e+30, %v822
  %v831 = vrot.slane %v701, 7
  %v832 = vrot.slane %v831, 2
  %v833 = vrot.slane %v717, 7
  %v834 = vrot.slane %v833, 2
  %v835 = vrot.slane %v718, 7
  %v836 = vrot.slane %v835, 2
  %v837 = vrot.slane %v719, 7
  %v838 = vrot.slane %v837, 2
  %v839 = vrot.slane %v702, 7
  %v840 = vrot.slane %v839, 2
  %v841 = vrot.slane %v720, 7
  %v842 = vrot.slane %v841, 2
  %v843 = vrot.slane %v721, 7
  %v844 = vrot.slane %v843, 2
  %v845 = vrot.slane %v722, 7
  %v846 = vrot.slane %v845, 2
  %v847 = vrot.slane %v703, 7
  %v848 = vrot.slane %v847, 2
  %v849 = vrot.slane %v723, 7
  %v850 = vrot.slane %v849, 2
  %v851 = vrot.slane %v724, 7
  %v852 = vrot.slane %v851, 2
  %v853 = vrot.slane %v725, 7
  %v854 = vrot.slane %v853, 2
  %v855 = vrot.slane %v704, 7
  %v856 = vrot.slane %v855, 2
  %v857 = vrot.slane %v726, 7
  %v858 = vrot.slane %v857, 2
  %v859 = vrot.slane %v727, 7
  %v860 = vrot.slane %v859, 2
  %v861 = vrot.slane %v728, 7
  %v862 = vrot.slane %v861, 2
  %v863 = vrot.slane %v705, 7
  %v864 = vrot.slane %v863, 2
  %v865 = vrot.slane %v729, 7
  %v866 = vrot.slane %v865, 2
  %v867 = vrot.slane %v730, 7
  %v868 = vrot.slane %v867, 2
  %v869 = vrot.slane %v731, 7
  %v870 = vrot.slane %v869, 2
  %v871 = vrot.slane %v706, 7
  %v872 = vrot.slane %v871, 2
  %v873 = vrot.slane %v732, 7
  %v874 = vrot.slane %v873, 2
  %v875 = vrot.slane %v733, 7
  %v876 = vrot.slane %v875, 2
  %v877 = vrot.slane %v734, 7
  %v878 = vrot.slane %v877, 2
  %v879 = vrot.slane %v707, 7
  %v880 = vrot.slane %v879, 2
  %v881 = vrot.slane %v735, 7
  %v882 = vrot.slane %v881, 2
  %v883 = vrot.slane %v736, 7
  %v884 = vrot.slane %v883, 2
  %v885 = vrot.slane %v737, 7
  %v886 = vrot.slane %v885, 2
  %v887 = vrot.slane %v708, 7
  %v888 = vrot.slane %v887, 2
  %v889 = vrot.slane %v738, 7
  %v890 = vrot.slane %v889, 2
  %v891 = vrot.slane %v739, 7
  %v892 = vrot.slane %v891, 2
  %v893 = vrot.slane %v740, 7
  %v894 = vrot.slane %v893, 2
  %v927 = vmax.f32 %v701, %v832
  %v928 = vmax.f32 %v717, %v834
  %v929 = vmax.f32 %v718, %v836
  %v930 = vmax.f32 %v719, %v838
  %v931 = vmax.f32 %v702, %v840
  %v932 = vmax.f32 %v720, %v842
  %v933 = vmax.f32 %v721, %v844
  %v934 = vmax.f32 %v722, %v846
  %v935 = vmax.f32 %v703, %v848
  %v936 = vmax.f32 %v723, %v850
  %v937 = vmax.f32 %v724, %v852
  %v938 = vmax.f32 %v725, %v854
  %v939 = vmax.f32 %v704, %v856
  %v940 = vmax.f32 %v726, %v858
  %v941 = vmax.f32 %v727, %v860
  %v942 = vmax.f32 %v728, %v862
  %v943 = vmax.f32 %v705, %v864
  %v944 = vmax.f32 %v729, %v866
  %v945 = vmax.f32 %v730, %v868
  %v946 = vmax.f32 %v731, %v870
  %v947 = vmax.f32 %v706, %v872
  %v948 = vmax.f32 %v732, %v874
  %v949 = vmax.f32 %v733, %v876
  %v950 = vmax.f32 %v734, %v878
  %v951 = vmax.f32 %v707, %v880
  %v952 = vmax.f32 %v735, %v882
  %v953 = vmax.f32 %v736, %v884
  %v954 = vmax.f32 %v737, %v886
  %v955 = vmax.f32 %v708, %v888
  %v956 = vmax.f32 %v738, %v890
  %v957 = vmax.f32 %v739, %v892
  %v958 = vmax.f32 %v740, %v894
  %v963 = vrot.slane %v827, 2
  %v964 = vrot.slane %v827, 4
  %v965 = vrot.slane %v827, 6
  %v966 = vrot.slane %v828, 2
  %v967 = vrot.slane %v828, 4
  %v968 = vrot.slane %v828, 6
  %v969 = vrot.slane %v829, 2
  %v970 = vrot.slane %v829, 4
  %v971 = vrot.slane %v829, 6
  %v972 = vrot.slane %v830, 2
  %v973 = vrot.slane %v830, 4
  %v974 = vrot.slane %v830, 6
  %v975 = vrot.slane %v827, 1
  %v976 = vrot.slane %v963, 1
  %v977 = vrot.slane %v964, 1
  %v978 = vrot.slane %v965, 1
  %v979 = vrot.slane %v828, 1
  %v980 = vrot.slane %v966, 1
  %v981 = vrot.slane %v967, 1
  %v982 = vrot.slane %v968, 1
  %v983 = vrot.slane %v829, 1
  %v984 = vrot.slane %v969, 1
  %v985 = vrot.slane %v970, 1
  %v986 = vrot.slane %v971, 1
  %v987 = vrot.slane %v830, 1
  %v988 = vrot.slane %v972, 1
  %v989 = vrot.slane %v973, 1
  %v990 = vrot.slane %v974, 1
  %v1023 = vmax.f32 %v927, %v827
  %v1024 = vmax.f32 %v928, %v975
  %v1025 = vmax.f32 %v929, %v963
  %v1026 = vmax.f32 %v930, %v976
  %v1027 = vmax.f32 %v931, %v964
  %v1028 = vmax.f32 %v932, %v977
  %v1029 = vmax.f32 %v933, %v965
  %v1030 = vmax.f32 %v934, %v978
  %v1031 = vmax.f32 %v935, %v828
  %v1032 = vmax.f32 %v936, %v979
  %v1033 = vmax.f32 %v937, %v966
  %v1034 = vmax.f32 %v938, %v980
  %v1035 = vmax.f32 %v939, %v967
  %v1036 = vmax.f32 %v940, %v981
  %v1037 = vmax.f32 %v941, %v968
  %v1038 = vmax.f32 %v942, %v982
  %v1039 = vmax.f32 %v943, %v829
  %v1040 = vmax.f32 %v944, %v983
  %v1041 = vmax.f32 %v945, %v969
  %v1042 = vmax.f32 %v946, %v984
  %v1043 = vmax.f32 %v947, %v970
  %v1044 = vmax.f32 %v948, %v985
  %v1045 = vmax.f32 %v949, %v971
  %v1046 = vmax.f32 %v950, %v986
  %v1047 = vmax.f32 %v951, %v830
  %v1048 = vmax.f32 %v952, %v987
  %v1049 = vmax.f32 %v953, %v972
  %v1050 = vmax.f32 %v954, %v988
  %v1051 = vmax.f32 %v955, %v973
  %v1052 = vmax.f32 %v956, %v989
  %v1053 = vmax.f32 %v957, %v974
  %v1054 = vmax.f32 %v958, %v990
  %v1055 = vld [vmem:[%s4] sm:$0x1]
  %v1057 = vperm.slane %v1055, 0
  %v1059 = vld [vmem:[%s6] sm:$0x1]
  %v1061 = vperm.slane %v1059, 0
  %v1062 = vmax.f32 %v1023, 0.0
  %v1063 = vmax.f32 %v1024, 0.0
  %v1064 = vmax.f32 %v1025, 0.0
  %v1065 = vmax.f32 %v1026, 0.0
  %v1066 = vmax.f32 %v1027, 0.0
  %v1067 = vmax.f32 %v1028, 0.0
  %v1068 = vmax.f32 %v1029, 0.0
  %v1069 = vmax.f32 %v1030, 0.0
  %v1070 = vmax.f32 %v1031, 0.0
  %v1071 = vmax.f32 %v1032, 0.0
  %v1072 = vmax.f32 %v1033, 0.0
  %v1073 = vmax.f32 %v1034, 0.0
  %v1074 = vmax.f32 %v1035, 0.0
  %v1075 = vmax.f32 %v1036, 0.0
  %v1076 = vmax.f32 %v1037, 0.0
  %v1077 = vmax.f32 %v1038, 0.0
  %v1078 = vmax.f32 %v1039, 0.0
  %v1079 = vmax.f32 %v1040, 0.0
  %v1080 = vmax.f32 %v1041, 0.0
  %v1081 = vmax.f32 %v1042, 0.0
  %v1082 = vmax.f32 %v1043, 0.0
  %v1083 = vmax.f32 %v1044, 0.0
  %v1084 = vmax.f32 %v1045, 0.0
  %v1085 = vmax.f32 %v1046, 0.0
  %v1086 = vmax.f32 %v1047, 0.0
  %v1087 = vmax.f32 %v1048, 0.0
  %v1088 = vmax.f32 %v1049, 0.0
  %v1089 = vmax.f32 %v1050, 0.0
  %v1090 = vmax.f32 %v1051, 0.0
  %v1091 = vmax.f32 %v1052, 0.0
  %v1092 = vmax.f32 %v1053, 0.0
  %v1093 = vmax.f32 %v1054, 0.0
  %v1126 = vperm.slane %v1062, 0
  %v1127 = vperm.slane %v1063, 0
  %v1128 = vperm.slane %v1064, 0
  %v1129 = vperm.slane %v1065, 0
  %v1130 = vperm.slane %v1066, 0
  %v1131 = vperm.slane %v1067, 0
  %v1132 = vperm.slane %v1068, 0
  %v1133 = vperm.slane %v1069, 0
  %v1134 = vperm.slane %v1070, 0
  %v1135 = vperm.slane %v1071, 0
  %v1136 = vperm.slane %v1072, 0
  %v1137 = vperm.slane %v1073, 0
  %v1138 = vperm.slane %v1074, 0
  %v1139 = vperm.slane %v1075, 0
  %v1140 = vperm.slane %v1076, 0
  %v1141 = vperm.slane %v1077, 0
  %v1142 = vperm.slane %v1078, 0
  %v1143 = vperm.slane %v1079, 0
  %v1144 = vperm.slane %v1080, 0
  %v1145 = vperm.slane %v1081, 0
  %v1146 = vperm.slane %v1082, 0
  %v1147 = vperm.slane %v1083, 0
  %v1148 = vperm.slane %v1084, 0
  %v1149 = vperm.slane %v1085, 0
  %v1150 = vperm.slane %v1086, 0
  %v1151 = vperm.slane %v1087, 0
  %v1152 = vperm.slane %v1088, 0
  %v1153 = vperm.slane %v1089, 0
  %v1154 = vperm.slane %v1090, 0
  %v1155 = vperm.slane %v1091, 0
  %v1156 = vperm.slane %v1092, 0
  %v1157 = vperm.slane %v1093, 0
  %v1158 = vsel %vm793, %v1127, %v1126
  %v1159 = vsel %vm795, %v1128, %v1158
  %v1160 = vsel %vm797, %v1129, %v1159
  %v1161 = vsel %vm799, %v1130, %v1160
  %v1162 = vsel %vm801, %v1131, %v1161
  %v1163 = vsel %vm803, %v1132, %v1162
  %v1164 = vsel %vm793, %v1135, %v1134
  %v1165 = vsel %vm795, %v1136, %v1164
  %v1166 = vsel %vm797, %v1137, %v1165
  %v1167 = vsel %vm799, %v1138, %v1166
  %v1168 = vsel %vm801, %v1139, %v1167
  %v1169 = vsel %vm803, %v1140, %v1168
  %v1170 = vsel %vm793, %v1143, %v1142
  %v1171 = vsel %vm795, %v1144, %v1170
  %v1172 = vsel %vm797, %v1145, %v1171
  %v1173 = vsel %vm799, %v1146, %v1172
  %v1174 = vsel %vm801, %v1147, %v1173
  %v1175 = vsel %vm803, %v1148, %v1174
  %v1176 = vsel %vm793, %v1151, %v1150
  %v1177 = vsel %vm795, %v1152, %v1176
  %v1178 = vsel %vm797, %v1153, %v1177
  %v1179 = vsel %vm799, %v1154, %v1178
  %v1180 = vsel %vm801, %v1155, %v1179
  %v1181 = vsel %vm803, %v1156, %v1180
  %v1190 = vsel %vm43, 0.0, %v1163
  %v1191 = vsel %vm43, 0.0, %v1169
  %v1192 = vsel %vm43, 0.0, %v1175
  %v1193 = vsel %vm43, 0.0, %v1181
  %v1194 = vsel %vm43, %v1133, 0.0
  %v1195 = vsel %vm43, %v1141, 0.0
  %v1196 = vsel %vm43, %v1149, 0.0
  %v1197 = vsel %vm43, %v1157, 0.0
  %v1198 = vpack.c.bf16 %v1190, %v1190
  %v1199 = vpack.c.bf16 %v1194, %v1194
  %v1200 = vpack.c.bf16 %v1191, %v1191
  %v1201 = vpack.c.bf16 %v1195, %v1195
  %v1202 = vpack.c.bf16 %v1192, %v1192
  %v1203 = vpack.c.bf16 %v1196, %v1196
  %v1204 = vpack.c.bf16 %v1193, %v1193
  %v1205 = vpack.c.bf16 %v1197, %v1197
  %v1206 = vld [vmem:[%s3] sm:$0xf]
  %v1207 = vld [vmem:[%s3 + $0x4] sm:$0xf]
  %v1208 = vld [vmem:[%s3 + $0x8] sm:$0xf]
  %v1209 = vld [vmem:[%s3 + $0xc] sm:$0xf]
  %v1210 = vld [vmem:[%s3 + $0x10] sm:$0xf]
  %v1211 = vld [vmem:[%s3 + $0x14] sm:$0xf]
  %v1212 = vld [vmem:[%s3 + $0x18] sm:$0xf]
  %v1213 = vld [vmem:[%s3 + $0x1c] sm:$0xf]
  %v1215 = vshrl.u32 %v1198, 16
  %v1217 = vrot.slane %v1215, 4
  %v1218 = vshll.u32 %v1198, 16
  %v1220 = vrot.slane %v1218, 5
  %v1221 = vor.u32 %v1217, %v1220
  %v1222 = vrot.slane %v1221, 4
  %v1224 = vshll.u32 %v1199, 16
  %v1226 = vrot.slane %v1224, 5
  %v1227 = vsel %vm98, %v1222, %v1226
  %v1229 = vshrl.u32 %v1200, 16
  %v1231 = vrot.slane %v1229, 4
  %v1232 = vshll.u32 %v1200, 16
  %v1234 = vrot.slane %v1232, 5
  %v1235 = vor.u32 %v1231, %v1234
  %v1236 = vrot.slane %v1235, 4
  %v1238 = vshll.u32 %v1201, 16
  %v1240 = vrot.slane %v1238, 5
  %v1241 = vsel %vm98, %v1236, %v1240
  %v1243 = vshrl.u32 %v1202, 16
  %v1245 = vrot.slane %v1243, 4
  %v1246 = vshll.u32 %v1202, 16
  %v1248 = vrot.slane %v1246, 5
  %v1249 = vor.u32 %v1245, %v1248
  %v1250 = vrot.slane %v1249, 4
  %v1252 = vshll.u32 %v1203, 16
  %v1254 = vrot.slane %v1252, 5
  %v1255 = vsel %vm98, %v1250, %v1254
  %v1257 = vshrl.u32 %v1204, 16
  %v1259 = vrot.slane %v1257, 4
  %v1260 = vshll.u32 %v1204, 16
  %v1262 = vrot.slane %v1260, 5
  %v1263 = vor.u32 %v1259, %v1262
  %v1264 = vrot.slane %v1263, 4
  %v1266 = vshll.u32 %v1205, 16
  %v1268 = vrot.slane %v1266, 5
  %v1269 = vsel %vm98, %v1264, %v1268
  %s1270 = scalar_lea.vmem %s3, 32
  %v1271 = vld [vmem:[%s1270] sm:$0xf]
  %v1272 = vld [vmem:[%s1270 + $0x4] sm:$0xf]
  %v1273 = vld [vmem:[%s1270 + $0x8] sm:$0xf]
  %v1274 = vld [vmem:[%s1270 + $0xc] sm:$0xf]
  %v1275 = vld [vmem:[%s1270 + $0x10] sm:$0xf]
  %v1276 = vld [vmem:[%s1270 + $0x14] sm:$0xf]
  %v1277 = vld [vmem:[%s1270 + $0x18] sm:$0xf]
  %v1278 = vld [vmem:[%s1270 + $0x1c] sm:$0xf]
  %v1279 = vunpack.c.l.b16 %v1227
  %v1280 = vunpack.c.l.b16 %v1241
  %v1281 = vunpack.c.l.b16 %v1255
  %v1282 = vunpack.c.l.b16 %v1269
  %v1283 = vpack.c.b16 %v1280, %v1279
  %v1284 = vpack.c.b16 %v1282, %v1281
  %v1293 = vunpack.c.l.b16 %v1271
  %v1294 = vunpack.c.l.b16 %v1272
  %v1295 = vunpack.c.l.b16 %v1273
  %v1296 = vunpack.c.l.b16 %v1274
  %v1297 = vunpack.c.l.b16 %v1275
  %v1298 = vunpack.c.l.b16 %v1276
  %v1299 = vunpack.c.l.b16 %v1277
  %v1300 = vunpack.c.l.b16 %v1278
  %v1301 = vpack.c.b16 %v1294, %v1293
  %v1302 = vpack.c.b16 %v1296, %v1295
  %v1303 = vpack.c.b16 %v1298, %v1297
  %v1304 = vpack.c.b16 %v1300, %v1299
  %v1310 = vsel %vm256, %v1283, 0
  %v1313 = vsel %vm256, %v1284, 0
  %1315 = vmatpush.bf16.msra.mxu0 0
  %1316 = vmatpush.bf16.msra.mxu0 0
  %1317 = vmatpush.bf16.msra.mxu0 0
  %1318 = vmatpush.bf16.msra.mxu0 0
  %1319 = vmatpush.bf16.msra.mxu0 %v1304
  %1320 = vmatpush.bf16.msra.mxu0 %v1303
  %1321 = vmatpush.bf16.msra.mxu0 %v1302
  %1322 = vmatpush.bf16.msra.mxu0 %v1301
  %1323 = vmatmul.bf16.gmra.mxu0 %v1310
  %v1324 = vpop.f32.mrf.mxu0
  %v1325 = vadd.f32 0.0, %v1324
  %v1326 = vpop.f32.mrf.mxu0
  %v1327 = vadd.f32 0.0, %v1326
  %1328 = vmatmul.bf16.gmra.mxu0 %v1313
  %v1329 = vpop.f32.mrf.mxu0
  %v1330 = vadd.f32 0.0, %v1329
  %v1331 = vpop.f32.mrf.mxu0
  %v1332 = vadd.f32 0.0, %v1331
  %1333 = vdwg.mxu0
  %v1338 = vunpack.c.l.b16 %v1198
  %v1339 = vunpack.c.l.b16 %v1200
  %v1340 = vunpack.c.l.b16 %v1202
  %v1341 = vunpack.c.l.b16 %v1204
  %v1342 = vpack.c.b16 %v1339, %v1338
  %v1343 = vpack.c.b16 %v1341, %v1340
  %v1352 = vunpack.c.l.b16 %v1206
  %v1353 = vunpack.c.l.b16 %v1207
  %v1354 = vunpack.c.l.b16 %v1208
  %v1355 = vunpack.c.l.b16 %v1209
  %v1356 = vunpack.c.l.b16 %v1210
  %v1357 = vunpack.c.l.b16 %v1211
  %v1358 = vunpack.c.l.b16 %v1212
  %v1359 = vunpack.c.l.b16 %v1213
  %v1360 = vpack.c.b16 %v1353, %v1352
  %v1361 = vpack.c.b16 %v1355, %v1354
  %v1362 = vpack.c.b16 %v1357, %v1356
  %v1363 = vpack.c.b16 %v1359, %v1358
  %v1369 = vsel %vm256, %v1342, 0
  %v1372 = vsel %vm256, %v1343, 0
  %1374 = vmatpush.bf16.msra.mxu0 0
  %1375 = vmatpush.bf16.msra.mxu0 0
  %1376 = vmatpush.bf16.msra.mxu0 0
  %1377 = vmatpush.bf16.msra.mxu0 0
  %1378 = vmatpush.bf16.msra.mxu0 %v1363
  %1379 = vmatpush.bf16.msra.mxu0 %v1362
  %1380 = vmatpush.bf16.msra.mxu0 %v1361
  %1381 = vmatpush.bf16.msra.mxu0 %v1360
  %1382 = vmatmul.bf16.gmra.mxu0 %v1369
  %v1383 = vpop.f32.mrf.mxu0
  %v1384 = vadd.f32 %v1325, %v1383
  %v1385 = vpop.f32.mrf.mxu0
  %v1386 = vadd.f32 %v1327, %v1385
  %1387 = vmatmul.bf16.gmra.mxu0 %v1372
  %v1388 = vpop.f32.mrf.mxu0
  %v1389 = vadd.f32 %v1330, %v1388
  %v1390 = vpop.f32.mrf.mxu0
  %v1391 = vadd.f32 %v1332, %v1390
  %1392 = vdwg.mxu0
  %v1397 = vrot.slane %v1198, 5
  %v1398 = vrot.slane %v1397, 4
  %v1399 = vrot.slane %v1199, 5
  %v1400 = vsel %vm463, %v1398, %v1399
  %v1401 = vrot.slane %v1200, 5
  %v1402 = vrot.slane %v1401, 4
  %v1403 = vrot.slane %v1201, 5
  %v1404 = vsel %vm463, %v1402, %v1403
  %v1405 = vrot.slane %v1202, 5
  %v1406 = vrot.slane %v1405, 4
  %v1407 = vrot.slane %v1203, 5
  %v1408 = vsel %vm463, %v1406, %v1407
  %v1409 = vrot.slane %v1204, 5
  %v1410 = vrot.slane %v1409, 4
  %v1411 = vrot.slane %v1205, 5
  %v1412 = vsel %vm463, %v1410, %v1411
  %s1413 = scalar_lea.vmem %s3, 64
  %v1414 = vld [vmem:[%s1413] sm:$0xf]
  %v1415 = vld [vmem:[%s1413 + $0x4] sm:$0xf]
  %v1416 = vld [vmem:[%s1413 + $0x8] sm:$0xf]
  %v1417 = vld [vmem:[%s1413 + $0xc] sm:$0xf]
  %v1418 = vld [vmem:[%s1413 + $0x10] sm:$0xf]
  %v1419 = vld [vmem:[%s1413 + $0x14] sm:$0xf]
  %v1420 = vld [vmem:[%s1413 + $0x18] sm:$0xf]
  %v1421 = vld [vmem:[%s1413 + $0x1c] sm:$0xf]
  %v1422 = vunpack.c.l.b16 %v1400
  %v1423 = vunpack.c.l.b16 %v1404
  %v1424 = vunpack.c.l.b16 %v1408
  %v1425 = vunpack.c.l.b16 %v1412
  %v1426 = vpack.c.b16 %v1423, %v1422
  %v1427 = vpack.c.b16 %v1425, %v1424
  %v1436 = vunpack.c.l.b16 %v1414
  %v1437 = vunpack.c.l.b16 %v1415
  %v1438 = vunpack.c.l.b16 %v1416
  %v1439 = vunpack.c.l.b16 %v1417
  %v1440 = vunpack.c.l.b16 %v1418
  %v1441 = vunpack.c.l.b16 %v1419
  %v1442 = vunpack.c.l.b16 %v1420
  %v1443 = vunpack.c.l.b16 %v1421
  %v1444 = vpack.c.b16 %v1437, %v1436
  %v1445 = vpack.c.b16 %v1439, %v1438
  %v1446 = vpack.c.b16 %v1441, %v1440
  %v1447 = vpack.c.b16 %v1443, %v1442
  %v1453 = vsel %vm256, %v1426, 0
  %v1456 = vsel %vm256, %v1427, 0
  %1458 = vmatpush.bf16.msra.mxu0 0
  %1459 = vmatpush.bf16.msra.mxu0 0
  %1460 = vmatpush.bf16.msra.mxu0 0
  %1461 = vmatpush.bf16.msra.mxu0 0
  %1462 = vmatpush.bf16.msra.mxu0 %v1447
  %1463 = vmatpush.bf16.msra.mxu0 %v1446
  %1464 = vmatpush.bf16.msra.mxu0 %v1445
  %1465 = vmatpush.bf16.msra.mxu0 %v1444
  %1466 = vmatmul.bf16.gmra.mxu0 %v1453
  %v1467 = vpop.f32.mrf.mxu0
  %v1468 = vadd.f32 0.0, %v1467
  %v1469 = vpop.f32.mrf.mxu0
  %v1470 = vadd.f32 0.0, %v1469
  %1471 = vmatmul.bf16.gmra.mxu0 %v1456
  %v1472 = vpop.f32.mrf.mxu0
  %v1473 = vadd.f32 0.0, %v1472
  %v1474 = vpop.f32.mrf.mxu0
  %v1475 = vadd.f32 0.0, %v1474
  %1476 = vdwg.mxu0
  %v1477 = vadd.f32 %v1384, %v1468
  %v1478 = vadd.f32 %v1386, %v1470
  %v1479 = vadd.f32 %v1389, %v1473
  %v1480 = vadd.f32 %v1391, %v1475
  %v1481 = vadd.f32 %v1477, %v1057
  %v1482 = vadd.f32 %v1478, %v1057
  %v1483 = vadd.f32 %v1479, %v1057
  %v1484 = vadd.f32 %v1480, %v1057
  %v1485 = vmax.f32 %v1481, 0.0
  %v1486 = vmax.f32 %v1482, 0.0
  %v1487 = vmax.f32 %v1483, 0.0
  %v1488 = vmax.f32 %v1484, 0.0
  %v1493 = vrot.slane %v1485, 7
  %v1494 = vrot.slane %v1486, 7
  %v1495 = vrot.slane %v1487, 7
  %v1496 = vrot.slane %v1488, 7
  %v1501 = vsel %vm43, 0.0, %v1493
  %v1502 = vsel %vm43, 0.0, %v1494
  %v1503 = vsel %vm43, 0.0, %v1495
  %v1504 = vsel %vm43, 0.0, %v1496
  %v1505 = vsel %vm43, %v1493, 0.0
  %v1506 = vsel %vm43, %v1494, 0.0
  %v1507 = vsel %vm43, %v1495, 0.0
  %v1508 = vsel %vm43, %v1496, 0.0
  %v1509 = vpack.c.bf16 %v1501, %v1501
  %v1510 = vpack.c.bf16 %v1505, %v1505
  %v1511 = vpack.c.bf16 %v1502, %v1502
  %v1512 = vpack.c.bf16 %v1506, %v1506
  %v1513 = vpack.c.bf16 %v1503, %v1503
  %v1514 = vpack.c.bf16 %v1507, %v1507
  %v1515 = vpack.c.bf16 %v1504, %v1504
  %v1516 = vpack.c.bf16 %v1508, %v1508
  %v1517 = vld [vmem:[%s5] sm:$0xf]
  %v1518 = vld [vmem:[%s5 + $0x4] sm:$0xf]
  %v1519 = vld [vmem:[%s5 + $0x8] sm:$0xf]
  %v1520 = vld [vmem:[%s5 + $0xc] sm:$0xf]
  %v1521 = vld [vmem:[%s5 + $0x10] sm:$0xf]
  %v1522 = vld [vmem:[%s5 + $0x14] sm:$0xf]
  %v1523 = vld [vmem:[%s5 + $0x18] sm:$0xf]
  %v1524 = vld [vmem:[%s5 + $0x1c] sm:$0xf]
  %v1526 = vshrl.u32 %v1509, 16
  %v1528 = vrot.slane %v1526, 4
  %v1529 = vshll.u32 %v1509, 16
  %v1531 = vrot.slane %v1529, 5
  %v1532 = vor.u32 %v1528, %v1531
  %v1533 = vrot.slane %v1532, 4
  %v1535 = vshll.u32 %v1510, 16
  %v1537 = vrot.slane %v1535, 5
  %v1538 = vsel %vm98, %v1533, %v1537
  %v1540 = vshrl.u32 %v1511, 16
  %v1542 = vrot.slane %v1540, 4
  %v1543 = vshll.u32 %v1511, 16
  %v1545 = vrot.slane %v1543, 5
  %v1546 = vor.u32 %v1542, %v1545
  %v1547 = vrot.slane %v1546, 4
  %v1549 = vshll.u32 %v1512, 16
  %v1551 = vrot.slane %v1549, 5
  %v1552 = vsel %vm98, %v1547, %v1551
  %v1554 = vshrl.u32 %v1513, 16
  %v1556 = vrot.slane %v1554, 4
  %v1557 = vshll.u32 %v1513, 16
  %v1559 = vrot.slane %v1557, 5
  %v1560 = vor.u32 %v1556, %v1559
  %v1561 = vrot.slane %v1560, 4
  %v1563 = vshll.u32 %v1514, 16
  %v1565 = vrot.slane %v1563, 5
  %v1566 = vsel %vm98, %v1561, %v1565
  %v1568 = vshrl.u32 %v1515, 16
  %v1570 = vrot.slane %v1568, 4
  %v1571 = vshll.u32 %v1515, 16
  %v1573 = vrot.slane %v1571, 5
  %v1574 = vor.u32 %v1570, %v1573
  %v1575 = vrot.slane %v1574, 4
  %v1577 = vshll.u32 %v1516, 16
  %v1579 = vrot.slane %v1577, 5
  %v1580 = vsel %vm98, %v1575, %v1579
  %s1581 = scalar_lea.vmem %s5, 32
  %v1582 = vld [vmem:[%s1581] sm:$0xf]
  %v1583 = vld [vmem:[%s1581 + $0x4] sm:$0xf]
  %v1584 = vld [vmem:[%s1581 + $0x8] sm:$0xf]
  %v1585 = vld [vmem:[%s1581 + $0xc] sm:$0xf]
  %v1586 = vld [vmem:[%s1581 + $0x10] sm:$0xf]
  %v1587 = vld [vmem:[%s1581 + $0x14] sm:$0xf]
  %v1588 = vld [vmem:[%s1581 + $0x18] sm:$0xf]
  %v1589 = vld [vmem:[%s1581 + $0x1c] sm:$0xf]
  %v1590 = vunpack.c.l.b16 %v1538
  %v1591 = vunpack.c.l.b16 %v1552
  %v1592 = vunpack.c.l.b16 %v1566
  %v1593 = vunpack.c.l.b16 %v1580
  %v1594 = vpack.c.b16 %v1591, %v1590
  %v1595 = vpack.c.b16 %v1593, %v1592
  %v1604 = vunpack.c.l.b16 %v1582
  %v1605 = vunpack.c.l.b16 %v1583
  %v1606 = vunpack.c.l.b16 %v1584
  %v1607 = vunpack.c.l.b16 %v1585
  %v1608 = vunpack.c.l.b16 %v1586
  %v1609 = vunpack.c.l.b16 %v1587
  %v1610 = vunpack.c.l.b16 %v1588
  %v1611 = vunpack.c.l.b16 %v1589
  %v1612 = vpack.c.b16 %v1605, %v1604
  %v1613 = vpack.c.b16 %v1607, %v1606
  %v1614 = vpack.c.b16 %v1609, %v1608
  %v1615 = vpack.c.b16 %v1611, %v1610
  %v1621 = vsel %vm256, %v1594, 0
  %v1624 = vsel %vm256, %v1595, 0
  %1626 = vmatpush.bf16.msra.mxu0 0
  %1627 = vmatpush.bf16.msra.mxu0 0
  %1628 = vmatpush.bf16.msra.mxu0 0
  %1629 = vmatpush.bf16.msra.mxu0 0
  %1630 = vmatpush.bf16.msra.mxu0 %v1615
  %1631 = vmatpush.bf16.msra.mxu0 %v1614
  %1632 = vmatpush.bf16.msra.mxu0 %v1613
  %1633 = vmatpush.bf16.msra.mxu0 %v1612
  %1634 = vmatmul.bf16.gmra.mxu0 %v1621
  %v1635 = vpop.f32.mrf.mxu0
  %v1636 = vadd.f32 0.0, %v1635
  %v1637 = vpop.f32.mrf.mxu0
  %v1638 = vadd.f32 0.0, %v1637
  %1639 = vmatmul.bf16.gmra.mxu0 %v1624
  %v1640 = vpop.f32.mrf.mxu0
  %v1641 = vadd.f32 0.0, %v1640
  %v1642 = vpop.f32.mrf.mxu0
  %v1643 = vadd.f32 0.0, %v1642
  %1644 = vdwg.mxu0
  %v1649 = vunpack.c.l.b16 %v1509
  %v1650 = vunpack.c.l.b16 %v1511
  %v1651 = vunpack.c.l.b16 %v1513
  %v1652 = vunpack.c.l.b16 %v1515
  %v1653 = vpack.c.b16 %v1650, %v1649
  %v1654 = vpack.c.b16 %v1652, %v1651
  %v1663 = vunpack.c.l.b16 %v1517
  %v1664 = vunpack.c.l.b16 %v1518
  %v1665 = vunpack.c.l.b16 %v1519
  %v1666 = vunpack.c.l.b16 %v1520
  %v1667 = vunpack.c.l.b16 %v1521
  %v1668 = vunpack.c.l.b16 %v1522
  %v1669 = vunpack.c.l.b16 %v1523
  %v1670 = vunpack.c.l.b16 %v1524
  %v1671 = vpack.c.b16 %v1664, %v1663
  %v1672 = vpack.c.b16 %v1666, %v1665
  %v1673 = vpack.c.b16 %v1668, %v1667
  %v1674 = vpack.c.b16 %v1670, %v1669
  %v1680 = vsel %vm256, %v1653, 0
  %v1683 = vsel %vm256, %v1654, 0
  %1685 = vmatpush.bf16.msra.mxu0 0
  %1686 = vmatpush.bf16.msra.mxu0 0
  %1687 = vmatpush.bf16.msra.mxu0 0
  %1688 = vmatpush.bf16.msra.mxu0 0
  %1689 = vmatpush.bf16.msra.mxu0 %v1674
  %1690 = vmatpush.bf16.msra.mxu0 %v1673
  %1691 = vmatpush.bf16.msra.mxu0 %v1672
  %1692 = vmatpush.bf16.msra.mxu0 %v1671
  %1693 = vmatmul.bf16.gmra.mxu0 %v1680
  %v1694 = vpop.f32.mrf.mxu0
  %v1695 = vadd.f32 %v1636, %v1694
  %v1696 = vpop.f32.mrf.mxu0
  %v1697 = vadd.f32 %v1638, %v1696
  %1698 = vmatmul.bf16.gmra.mxu0 %v1683
  %v1699 = vpop.f32.mrf.mxu0
  %v1700 = vadd.f32 %v1641, %v1699
  %v1701 = vpop.f32.mrf.mxu0
  %v1702 = vadd.f32 %v1643, %v1701
  %1703 = vdwg.mxu0
  %v1708 = vrot.slane %v1509, 5
  %v1709 = vrot.slane %v1708, 4
  %v1710 = vrot.slane %v1510, 5
  %v1711 = vsel %vm463, %v1709, %v1710
  %v1712 = vrot.slane %v1511, 5
  %v1713 = vrot.slane %v1712, 4
  %v1714 = vrot.slane %v1512, 5
  %v1715 = vsel %vm463, %v1713, %v1714
  %v1716 = vrot.slane %v1513, 5
  %v1717 = vrot.slane %v1716, 4
  %v1718 = vrot.slane %v1514, 5
  %v1719 = vsel %vm463, %v1717, %v1718
  %v1720 = vrot.slane %v1515, 5
  %v1721 = vrot.slane %v1720, 4
  %v1722 = vrot.slane %v1516, 5
  %v1723 = vsel %vm463, %v1721, %v1722
  %s1724 = scalar_lea.vmem %s5, 64
  %v1725 = vld [vmem:[%s1724] sm:$0xf]
  %v1726 = vld [vmem:[%s1724 + $0x4] sm:$0xf]
  %v1727 = vld [vmem:[%s1724 + $0x8] sm:$0xf]
  %v1728 = vld [vmem:[%s1724 + $0xc] sm:$0xf]
  %v1729 = vld [vmem:[%s1724 + $0x10] sm:$0xf]
  %v1730 = vld [vmem:[%s1724 + $0x14] sm:$0xf]
  %v1731 = vld [vmem:[%s1724 + $0x18] sm:$0xf]
  %v1732 = vld [vmem:[%s1724 + $0x1c] sm:$0xf]
  %v1733 = vunpack.c.l.b16 %v1711
  %v1734 = vunpack.c.l.b16 %v1715
  %v1735 = vunpack.c.l.b16 %v1719
  %v1736 = vunpack.c.l.b16 %v1723
  %v1737 = vpack.c.b16 %v1734, %v1733
  %v1738 = vpack.c.b16 %v1736, %v1735
  %v1747 = vunpack.c.l.b16 %v1725
  %v1748 = vunpack.c.l.b16 %v1726
  %v1749 = vunpack.c.l.b16 %v1727
  %v1750 = vunpack.c.l.b16 %v1728
  %v1751 = vunpack.c.l.b16 %v1729
  %v1752 = vunpack.c.l.b16 %v1730
  %v1753 = vunpack.c.l.b16 %v1731
  %v1754 = vunpack.c.l.b16 %v1732
  %v1755 = vpack.c.b16 %v1748, %v1747
  %v1756 = vpack.c.b16 %v1750, %v1749
  %v1757 = vpack.c.b16 %v1752, %v1751
  %v1758 = vpack.c.b16 %v1754, %v1753
  %v1764 = vsel %vm256, %v1737, 0
  %v1767 = vsel %vm256, %v1738, 0
  %1769 = vmatpush.bf16.msra.mxu0 0
  %1770 = vmatpush.bf16.msra.mxu0 0
  %1771 = vmatpush.bf16.msra.mxu0 0
  %1772 = vmatpush.bf16.msra.mxu0 0
  %1773 = vmatpush.bf16.msra.mxu0 %v1758
  %1774 = vmatpush.bf16.msra.mxu0 %v1757
  %1775 = vmatpush.bf16.msra.mxu0 %v1756
  %1776 = vmatpush.bf16.msra.mxu0 %v1755
  %1777 = vmatmul.bf16.gmra.mxu0 %v1764
  %v1778 = vpop.f32.mrf.mxu0
  %v1779 = vadd.f32 0.0, %v1778
  %v1780 = vpop.f32.mrf.mxu0
  %v1781 = vadd.f32 0.0, %v1780
  %1782 = vmatmul.bf16.gmra.mxu0 %v1767
  %v1783 = vpop.f32.mrf.mxu0
  %v1784 = vadd.f32 0.0, %v1783
  %v1785 = vpop.f32.mrf.mxu0
  %v1786 = vadd.f32 0.0, %v1785
  %1787 = vdwg.mxu0
  %v1788 = vadd.f32 %v1695, %v1779
  %v1789 = vadd.f32 %v1697, %v1781
  %v1790 = vadd.f32 %v1700, %v1784
  %v1791 = vadd.f32 %v1702, %v1786
  %v1796 = vrot.slane %v1788, 2
  %v1797 = vrot.slane %v1788, 4
  %v1798 = vrot.slane %v1788, 6
  %v1799 = vrot.slane %v1789, 2
  %v1800 = vrot.slane %v1789, 4
  %v1801 = vrot.slane %v1789, 6
  %v1802 = vrot.slane %v1790, 2
  %v1803 = vrot.slane %v1790, 4
  %v1804 = vrot.slane %v1790, 6
  %v1805 = vrot.slane %v1791, 2
  %v1806 = vrot.slane %v1791, 4
  %v1807 = vrot.slane %v1791, 6
  %v1808 = vrot.slane %v1788, 1
  %v1809 = vrot.slane %v1796, 1
  %v1810 = vrot.slane %v1797, 1
  %v1811 = vrot.slane %v1798, 1
  %v1812 = vrot.slane %v1789, 1
  %v1813 = vrot.slane %v1799, 1
  %v1814 = vrot.slane %v1800, 1
  %v1815 = vrot.slane %v1801, 1
  %v1816 = vrot.slane %v1790, 1
  %v1817 = vrot.slane %v1802, 1
  %v1818 = vrot.slane %v1803, 1
  %v1819 = vrot.slane %v1804, 1
  %v1820 = vrot.slane %v1791, 1
  %v1821 = vrot.slane %v1805, 1
  %v1822 = vrot.slane %v1806, 1
  %v1823 = vrot.slane %v1807, 1
  %v1856 = vadd.f32 %v1062, %v1788
  %v1857 = vadd.f32 %v1063, %v1808
  %v1858 = vadd.f32 %v1064, %v1796
  %v1859 = vadd.f32 %v1065, %v1809
  %v1860 = vadd.f32 %v1066, %v1797
  %v1861 = vadd.f32 %v1067, %v1810
  %v1862 = vadd.f32 %v1068, %v1798
  %v1863 = vadd.f32 %v1069, %v1811
  %v1864 = vadd.f32 %v1070, %v1789
  %v1865 = vadd.f32 %v1071, %v1812
  %v1866 = vadd.f32 %v1072, %v1799
  %v1867 = vadd.f32 %v1073, %v1813
  %v1868 = vadd.f32 %v1074, %v1800
  %v1869 = vadd.f32 %v1075, %v1814
  %v1870 = vadd.f32 %v1076, %v1801
  %v1871 = vadd.f32 %v1077, %v1815
  %v1872 = vadd.f32 %v1078, %v1790
  %v1873 = vadd.f32 %v1079, %v1816
  %v1874 = vadd.f32 %v1080, %v1802
  %v1875 = vadd.f32 %v1081, %v1817
  %v1876 = vadd.f32 %v1082, %v1803
  %v1877 = vadd.f32 %v1083, %v1818
  %v1878 = vadd.f32 %v1084, %v1804
  %v1879 = vadd.f32 %v1085, %v1819
  %v1880 = vadd.f32 %v1086, %v1791
  %v1881 = vadd.f32 %v1087, %v1820
  %v1882 = vadd.f32 %v1088, %v1805
  %v1883 = vadd.f32 %v1089, %v1821
  %v1884 = vadd.f32 %v1090, %v1806
  %v1885 = vadd.f32 %v1091, %v1822
  %v1886 = vadd.f32 %v1092, %v1807
  %v1887 = vadd.f32 %v1093, %v1823
  %v1888 = vrot.slane %v1061, 2
  %v1889 = vrot.slane %v1061, 4
  %v1890 = vrot.slane %v1061, 6
  %v1891 = vrot.slane %v1061, 1
  %v1892 = vrot.slane %v1888, 1
  %v1893 = vrot.slane %v1889, 1
  %v1894 = vrot.slane %v1890, 1
  %v1903 = vadd.f32 %v1856, %v1061
  %v1904 = vadd.f32 %v1857, %v1891
  %v1905 = vadd.f32 %v1858, %v1888
  %v1906 = vadd.f32 %v1859, %v1892
  %v1907 = vadd.f32 %v1860, %v1889
  %v1908 = vadd.f32 %v1861, %v1893
  %v1909 = vadd.f32 %v1862, %v1890
  %v1910 = vadd.f32 %v1863, %v1894
  %v1911 = vadd.f32 %v1864, %v1061
  %v1912 = vadd.f32 %v1865, %v1891
  %v1913 = vadd.f32 %v1866, %v1888
  %v1914 = vadd.f32 %v1867, %v1892
  %v1915 = vadd.f32 %v1868, %v1889
  %v1916 = vadd.f32 %v1869, %v1893
  %v1917 = vadd.f32 %v1870, %v1890
  %v1918 = vadd.f32 %v1871, %v1894
  %v1919 = vadd.f32 %v1872, %v1061
  %v1920 = vadd.f32 %v1873, %v1891
  %v1921 = vadd.f32 %v1874, %v1888
  %v1922 = vadd.f32 %v1875, %v1892
  %v1923 = vadd.f32 %v1876, %v1889
  %v1924 = vadd.f32 %v1877, %v1893
  %v1925 = vadd.f32 %v1878, %v1890
  %v1926 = vadd.f32 %v1879, %v1894
  %v1927 = vadd.f32 %v1880, %v1061
  %v1928 = vadd.f32 %v1881, %v1891
  %v1929 = vadd.f32 %v1882, %v1888
  %v1930 = vadd.f32 %v1883, %v1892
  %v1931 = vadd.f32 %v1884, %v1889
  %v1932 = vadd.f32 %v1885, %v1893
  %v1933 = vadd.f32 %v1886, %v1890
  %v1934 = vadd.f32 %v1887, %v1894
  %v1935 = vmax.f32 %v1903, 0.0
  %v1936 = vmax.f32 %v1904, 0.0
  %v1937 = vmax.f32 %v1905, 0.0
  %v1938 = vmax.f32 %v1906, 0.0
  %v1939 = vmax.f32 %v1907, 0.0
  %v1940 = vmax.f32 %v1908, 0.0
  %v1941 = vmax.f32 %v1909, 0.0
  %v1942 = vmax.f32 %v1910, 0.0
  %v1943 = vmax.f32 %v1911, 0.0
  %v1944 = vmax.f32 %v1912, 0.0
  %v1945 = vmax.f32 %v1913, 0.0
  %v1946 = vmax.f32 %v1914, 0.0
  %v1947 = vmax.f32 %v1915, 0.0
  %v1948 = vmax.f32 %v1916, 0.0
  %v1949 = vmax.f32 %v1917, 0.0
  %v1950 = vmax.f32 %v1918, 0.0
  %v1951 = vmax.f32 %v1919, 0.0
  %v1952 = vmax.f32 %v1920, 0.0
  %v1953 = vmax.f32 %v1921, 0.0
  %v1954 = vmax.f32 %v1922, 0.0
  %v1955 = vmax.f32 %v1923, 0.0
  %v1956 = vmax.f32 %v1924, 0.0
  %v1957 = vmax.f32 %v1925, 0.0
  %v1958 = vmax.f32 %v1926, 0.0
  %v1959 = vmax.f32 %v1927, 0.0
  %v1960 = vmax.f32 %v1928, 0.0
  %v1961 = vmax.f32 %v1929, 0.0
  %v1962 = vmax.f32 %v1930, 0.0
  %v1963 = vmax.f32 %v1931, 0.0
  %v1964 = vmax.f32 %v1932, 0.0
  %v1965 = vmax.f32 %v1933, 0.0
  %v1966 = vmax.f32 %v1934, 0.0
  %v1999 = vperm.slane %v1935, 0
  %v2000 = vperm.slane %v1936, 0
  %v2001 = vperm.slane %v1937, 0
  %v2002 = vperm.slane %v1938, 0
  %v2003 = vperm.slane %v1939, 0
  %v2004 = vperm.slane %v1940, 0
  %v2005 = vperm.slane %v1941, 0
  %v2006 = vperm.slane %v1942, 0
  %v2007 = vperm.slane %v1943, 0
  %v2008 = vperm.slane %v1944, 0
  %v2009 = vperm.slane %v1945, 0
  %v2010 = vperm.slane %v1946, 0
  %v2011 = vperm.slane %v1947, 0
  %v2012 = vperm.slane %v1948, 0
  %v2013 = vperm.slane %v1949, 0
  %v2014 = vperm.slane %v1950, 0
  %v2015 = vperm.slane %v1951, 0
  %v2016 = vperm.slane %v1952, 0
  %v2017 = vperm.slane %v1953, 0
  %v2018 = vperm.slane %v1954, 0
  %v2019 = vperm.slane %v1955, 0
  %v2020 = vperm.slane %v1956, 0
  %v2021 = vperm.slane %v1957, 0
  %v2022 = vperm.slane %v1958, 0
  %v2023 = vperm.slane %v1959, 0
  %v2024 = vperm.slane %v1960, 0
  %v2025 = vperm.slane %v1961, 0
  %v2026 = vperm.slane %v1962, 0
  %v2027 = vperm.slane %v1963, 0
  %v2028 = vperm.slane %v1964, 0
  %v2029 = vperm.slane %v1965, 0
  %v2030 = vperm.slane %v1966, 0
  %v2031 = vsel %vm793, %v2000, %v1999
  %v2032 = vsel %vm795, %v2001, %v2031
  %v2033 = vsel %vm797, %v2002, %v2032
  %v2034 = vsel %vm799, %v2003, %v2033
  %v2035 = vsel %vm801, %v2004, %v2034
  %v2036 = vsel %vm803, %v2005, %v2035
  %v2037 = vsel %vm793, %v2008, %v2007
  %v2038 = vsel %vm795, %v2009, %v2037
  %v2039 = vsel %vm797, %v2010, %v2038
  %v2040 = vsel %vm799, %v2011, %v2039
  %v2041 = vsel %vm801, %v2012, %v2040
  %v2042 = vsel %vm803, %v2013, %v2041
  %v2043 = vsel %vm793, %v2016, %v2015
  %v2044 = vsel %vm795, %v2017, %v2043
  %v2045 = vsel %vm797, %v2018, %v2044
  %v2046 = vsel %vm799, %v2019, %v2045
  %v2047 = vsel %vm801, %v2020, %v2046
  %v2048 = vsel %vm803, %v2021, %v2047
  %v2049 = vsel %vm793, %v2024, %v2023
  %v2050 = vsel %vm795, %v2025, %v2049
  %v2051 = vsel %vm797, %v2026, %v2050
  %v2052 = vsel %vm799, %v2027, %v2051
  %v2053 = vsel %vm801, %v2028, %v2052
  %v2054 = vsel %vm803, %v2029, %v2053
  %v2063 = vsel %vm43, 0.0, %v2036
  %v2064 = vsel %vm43, 0.0, %v2042
  %v2065 = vsel %vm43, 0.0, %v2048
  %v2066 = vsel %vm43, 0.0, %v2054
  %v2067 = vsel %vm43, %v2006, 0.0
  %v2068 = vsel %vm43, %v2014, 0.0
  %v2069 = vsel %vm43, %v2022, 0.0
  %v2070 = vsel %vm43, %v2030, 0.0
  %v2071 = vpack.c.bf16 %v2063, %v2063
  %v2072 = vpack.c.bf16 %v2067, %v2067
  %v2073 = vpack.c.bf16 %v2064, %v2064
  %v2074 = vpack.c.bf16 %v2068, %v2068
  %v2075 = vpack.c.bf16 %v2065, %v2065
  %v2076 = vpack.c.bf16 %v2069, %v2069
  %v2077 = vpack.c.bf16 %v2066, %v2066
  %v2078 = vpack.c.bf16 %v2070, %v2070
  %v2080 = vshrl.u32 %v2071, 16
  %v2082 = vrot.slane %v2080, 4
  %v2083 = vshll.u32 %v2071, 16
  %v2085 = vrot.slane %v2083, 5
  %v2086 = vor.u32 %v2082, %v2085
  %v2087 = vrot.slane %v2086, 4
  %v2089 = vshll.u32 %v2072, 16
  %v2091 = vrot.slane %v2089, 5
  %v2092 = vsel %vm98, %v2087, %v2091
  %v2094 = vshrl.u32 %v2073, 16
  %v2096 = vrot.slane %v2094, 4
  %v2097 = vshll.u32 %v2073, 16
  %v2099 = vrot.slane %v2097, 5
  %v2100 = vor.u32 %v2096, %v2099
  %v2101 = vrot.slane %v2100, 4
  %v2103 = vshll.u32 %v2074, 16
  %v2105 = vrot.slane %v2103, 5
  %v2106 = vsel %vm98, %v2101, %v2105
  %v2108 = vshrl.u32 %v2075, 16
  %v2110 = vrot.slane %v2108, 4
  %v2111 = vshll.u32 %v2075, 16
  %v2113 = vrot.slane %v2111, 5
  %v2114 = vor.u32 %v2110, %v2113
  %v2115 = vrot.slane %v2114, 4
  %v2117 = vshll.u32 %v2076, 16
  %v2119 = vrot.slane %v2117, 5
  %v2120 = vsel %vm98, %v2115, %v2119
  %v2122 = vshrl.u32 %v2077, 16
  %v2124 = vrot.slane %v2122, 4
  %v2125 = vshll.u32 %v2077, 16
  %v2127 = vrot.slane %v2125, 5
  %v2128 = vor.u32 %v2124, %v2127
  %v2129 = vrot.slane %v2128, 4
  %v2131 = vshll.u32 %v2078, 16
  %v2133 = vrot.slane %v2131, 5
  %v2134 = vsel %vm98, %v2129, %v2133
  %v2135 = vunpack.c.l.b16 %v2092
  %v2136 = vunpack.c.l.b16 %v2106
  %v2137 = vunpack.c.l.b16 %v2120
  %v2138 = vunpack.c.l.b16 %v2134
  %v2139 = vpack.c.b16 %v2136, %v2135
  %v2140 = vpack.c.b16 %v2138, %v2137
  %v2142 = vsel %vm256, %v2139, 0
  %v2145 = vsel %vm256, %v2140, 0
  %2147 = vmatpush.bf16.msra.mxu0 0
  %2148 = vmatpush.bf16.msra.mxu0 0
  %2149 = vmatpush.bf16.msra.mxu0 0
  %2150 = vmatpush.bf16.msra.mxu0 0
  %2151 = vmatpush.bf16.msra.mxu0 %v1304
  %2152 = vmatpush.bf16.msra.mxu0 %v1303
  %2153 = vmatpush.bf16.msra.mxu0 %v1302
  %2154 = vmatpush.bf16.msra.mxu0 %v1301
  %2155 = vmatmul.bf16.gmra.mxu0 %v2142
  %v2156 = vpop.f32.mrf.mxu0
  %v2157 = vadd.f32 0.0, %v2156
  %v2158 = vpop.f32.mrf.mxu0
  %v2159 = vadd.f32 0.0, %v2158
  %2160 = vmatmul.bf16.gmra.mxu0 %v2145
  %v2161 = vpop.f32.mrf.mxu0
  %v2162 = vadd.f32 0.0, %v2161
  %v2163 = vpop.f32.mrf.mxu0
  %v2164 = vadd.f32 0.0, %v2163
  %2165 = vdwg.mxu0
  %v2170 = vunpack.c.l.b16 %v2071
  %v2171 = vunpack.c.l.b16 %v2073
  %v2172 = vunpack.c.l.b16 %v2075
  %v2173 = vunpack.c.l.b16 %v2077
  %v2174 = vpack.c.b16 %v2171, %v2170
  %v2175 = vpack.c.b16 %v2173, %v2172
  %v2177 = vsel %vm256, %v2174, 0
  %v2180 = vsel %vm256, %v2175, 0
  %2182 = vmatpush.bf16.msra.mxu0 0
  %2183 = vmatpush.bf16.msra.mxu0 0
  %2184 = vmatpush.bf16.msra.mxu0 0
  %2185 = vmatpush.bf16.msra.mxu0 0
  %2186 = vmatpush.bf16.msra.mxu0 %v1363
  %2187 = vmatpush.bf16.msra.mxu0 %v1362
  %2188 = vmatpush.bf16.msra.mxu0 %v1361
  %2189 = vmatpush.bf16.msra.mxu0 %v1360
  %2190 = vmatmul.bf16.gmra.mxu0 %v2177
  %v2191 = vpop.f32.mrf.mxu0
  %v2192 = vadd.f32 %v2157, %v2191
  %v2193 = vpop.f32.mrf.mxu0
  %v2194 = vadd.f32 %v2159, %v2193
  %2195 = vmatmul.bf16.gmra.mxu0 %v2180
  %v2196 = vpop.f32.mrf.mxu0
  %v2197 = vadd.f32 %v2162, %v2196
  %v2198 = vpop.f32.mrf.mxu0
  %v2199 = vadd.f32 %v2164, %v2198
  %2200 = vdwg.mxu0
  %v2205 = vrot.slane %v2071, 5
  %v2206 = vrot.slane %v2205, 4
  %v2207 = vrot.slane %v2072, 5
  %v2208 = vsel %vm463, %v2206, %v2207
  %v2209 = vrot.slane %v2073, 5
  %v2210 = vrot.slane %v2209, 4
  %v2211 = vrot.slane %v2074, 5
  %v2212 = vsel %vm463, %v2210, %v2211
  %v2213 = vrot.slane %v2075, 5
  %v2214 = vrot.slane %v2213, 4
  %v2215 = vrot.slane %v2076, 5
  %v2216 = vsel %vm463, %v2214, %v2215
  %v2217 = vrot.slane %v2077, 5
  %v2218 = vrot.slane %v2217, 4
  %v2219 = vrot.slane %v2078, 5
  %v2220 = vsel %vm463, %v2218, %v2219
  %v2221 = vunpack.c.l.b16 %v2208
  %v2222 = vunpack.c.l.b16 %v2212
  %v2223 = vunpack.c.l.b16 %v2216
  %v2224 = vunpack.c.l.b16 %v2220
  %v2225 = vpack.c.b16 %v2222, %v2221
  %v2226 = vpack.c.b16 %v2224, %v2223
  %v2228 = vsel %vm256, %v2225, 0
  %v2231 = vsel %vm256, %v2226, 0
  %2233 = vmatpush.bf16.msra.mxu0 0
  %2234 = vmatpush.bf16.msra.mxu0 0
  %2235 = vmatpush.bf16.msra.mxu0 0
  %2236 = vmatpush.bf16.msra.mxu0 0
  %2237 = vmatpush.bf16.msra.mxu0 %v1447
  %2238 = vmatpush.bf16.msra.mxu0 %v1446
  %2239 = vmatpush.bf16.msra.mxu0 %v1445
  %2240 = vmatpush.bf16.msra.mxu0 %v1444
  %2241 = vmatmul.bf16.gmra.mxu0 %v2228
  %v2242 = vpop.f32.mrf.mxu0
  %v2243 = vadd.f32 0.0, %v2242
  %v2244 = vpop.f32.mrf.mxu0
  %v2245 = vadd.f32 0.0, %v2244
  %2246 = vmatmul.bf16.gmra.mxu0 %v2231
  %v2247 = vpop.f32.mrf.mxu0
  %v2248 = vadd.f32 0.0, %v2247
  %v2249 = vpop.f32.mrf.mxu0
  %v2250 = vadd.f32 0.0, %v2249
  %2251 = vdwg.mxu0
  %v2252 = vadd.f32 %v2192, %v2243
  %v2253 = vadd.f32 %v2194, %v2245
  %v2254 = vadd.f32 %v2197, %v2248
  %v2255 = vadd.f32 %v2199, %v2250
  %v2256 = vadd.f32 %v2252, %v1057
  %v2257 = vadd.f32 %v2253, %v1057
  %v2258 = vadd.f32 %v2254, %v1057
  %v2259 = vadd.f32 %v2255, %v1057
  %v2260 = vmax.f32 %v2256, 0.0
  %v2261 = vmax.f32 %v2257, 0.0
  %v2262 = vmax.f32 %v2258, 0.0
  %v2263 = vmax.f32 %v2259, 0.0
  %v2268 = vrot.slane %v2260, 7
  %v2269 = vrot.slane %v2261, 7
  %v2270 = vrot.slane %v2262, 7
  %v2271 = vrot.slane %v2263, 7
  %v2276 = vsel %vm43, 0.0, %v2268
  %v2277 = vsel %vm43, 0.0, %v2269
  %v2278 = vsel %vm43, 0.0, %v2270
  %v2279 = vsel %vm43, 0.0, %v2271
  %v2280 = vsel %vm43, %v2268, 0.0
  %v2281 = vsel %vm43, %v2269, 0.0
  %v2282 = vsel %vm43, %v2270, 0.0
  %v2283 = vsel %vm43, %v2271, 0.0
  %v2284 = vpack.c.bf16 %v2276, %v2276
  %v2285 = vpack.c.bf16 %v2280, %v2280
  %v2286 = vpack.c.bf16 %v2277, %v2277
  %v2287 = vpack.c.bf16 %v2281, %v2281
  %v2288 = vpack.c.bf16 %v2278, %v2278
  %v2289 = vpack.c.bf16 %v2282, %v2282
  %v2290 = vpack.c.bf16 %v2279, %v2279
  %v2291 = vpack.c.bf16 %v2283, %v2283
  %v2293 = vshrl.u32 %v2284, 16
  %v2295 = vrot.slane %v2293, 4
  %v2296 = vshll.u32 %v2284, 16
  %v2298 = vrot.slane %v2296, 5
  %v2299 = vor.u32 %v2295, %v2298
  %v2300 = vrot.slane %v2299, 4
  %v2302 = vshll.u32 %v2285, 16
  %v2304 = vrot.slane %v2302, 5
  %v2305 = vsel %vm98, %v2300, %v2304
  %v2307 = vshrl.u32 %v2286, 16
  %v2309 = vrot.slane %v2307, 4
  %v2310 = vshll.u32 %v2286, 16
  %v2312 = vrot.slane %v2310, 5
  %v2313 = vor.u32 %v2309, %v2312
  %v2314 = vrot.slane %v2313, 4
  %v2316 = vshll.u32 %v2287, 16
  %v2318 = vrot.slane %v2316, 5
  %v2319 = vsel %vm98, %v2314, %v2318
  %v2321 = vshrl.u32 %v2288, 16
  %v2323 = vrot.slane %v2321, 4
  %v2324 = vshll.u32 %v2288, 16
  %v2326 = vrot.slane %v2324, 5
  %v2327 = vor.u32 %v2323, %v2326
  %v2328 = vrot.slane %v2327, 4
  %v2330 = vshll.u32 %v2289, 16
  %v2332 = vrot.slane %v2330, 5
  %v2333 = vsel %vm98, %v2328, %v2332
  %v2335 = vshrl.u32 %v2290, 16
  %v2337 = vrot.slane %v2335, 4
  %v2338 = vshll.u32 %v2290, 16
  %v2340 = vrot.slane %v2338, 5
  %v2341 = vor.u32 %v2337, %v2340
  %v2342 = vrot.slane %v2341, 4
  %v2344 = vshll.u32 %v2291, 16
  %v2346 = vrot.slane %v2344, 5
  %v2347 = vsel %vm98, %v2342, %v2346
  %v2348 = vunpack.c.l.b16 %v2305
  %v2349 = vunpack.c.l.b16 %v2319
  %v2350 = vunpack.c.l.b16 %v2333
  %v2351 = vunpack.c.l.b16 %v2347
  %v2352 = vpack.c.b16 %v2349, %v2348
  %v2353 = vpack.c.b16 %v2351, %v2350
  %v2355 = vsel %vm256, %v2352, 0
  %v2358 = vsel %vm256, %v2353, 0
  %2360 = vmatpush.bf16.msra.mxu0 0
  %2361 = vmatpush.bf16.msra.mxu0 0
  %2362 = vmatpush.bf16.msra.mxu0 0
  %2363 = vmatpush.bf16.msra.mxu0 0
  %2364 = vmatpush.bf16.msra.mxu0 %v1615
  %2365 = vmatpush.bf16.msra.mxu0 %v1614
  %2366 = vmatpush.bf16.msra.mxu0 %v1613
  %2367 = vmatpush.bf16.msra.mxu0 %v1612
  %2368 = vmatmul.bf16.gmra.mxu0 %v2355
  %v2369 = vpop.f32.mrf.mxu0
  %v2370 = vadd.f32 0.0, %v2369
  %v2371 = vpop.f32.mrf.mxu0
  %v2372 = vadd.f32 0.0, %v2371
  %2373 = vmatmul.bf16.gmra.mxu0 %v2358
  %v2374 = vpop.f32.mrf.mxu0
  %v2375 = vadd.f32 0.0, %v2374
  %v2376 = vpop.f32.mrf.mxu0
  %v2377 = vadd.f32 0.0, %v2376
  %2378 = vdwg.mxu0
  %v2383 = vunpack.c.l.b16 %v2284
  %v2384 = vunpack.c.l.b16 %v2286
  %v2385 = vunpack.c.l.b16 %v2288
  %v2386 = vunpack.c.l.b16 %v2290
  %v2387 = vpack.c.b16 %v2384, %v2383
  %v2388 = vpack.c.b16 %v2386, %v2385
  %v2390 = vsel %vm256, %v2387, 0
  %v2393 = vsel %vm256, %v2388, 0
  %2395 = vmatpush.bf16.msra.mxu0 0
  %2396 = vmatpush.bf16.msra.mxu0 0
  %2397 = vmatpush.bf16.msra.mxu0 0
  %2398 = vmatpush.bf16.msra.mxu0 0
  %2399 = vmatpush.bf16.msra.mxu0 %v1674
  %2400 = vmatpush.bf16.msra.mxu0 %v1673
  %2401 = vmatpush.bf16.msra.mxu0 %v1672
  %2402 = vmatpush.bf16.msra.mxu0 %v1671
  %2403 = vmatmul.bf16.gmra.mxu0 %v2390
  %v2404 = vpop.f32.mrf.mxu0
  %v2405 = vadd.f32 %v2370, %v2404
  %v2406 = vpop.f32.mrf.mxu0
  %v2407 = vadd.f32 %v2372, %v2406
  %2408 = vmatmul.bf16.gmra.mxu0 %v2393
  %v2409 = vpop.f32.mrf.mxu0
  %v2410 = vadd.f32 %v2375, %v2409
  %v2411 = vpop.f32.mrf.mxu0
  %v2412 = vadd.f32 %v2377, %v2411
  %2413 = vdwg.mxu0
  %v2418 = vrot.slane %v2284, 5
  %v2419 = vrot.slane %v2418, 4
  %v2420 = vrot.slane %v2285, 5
  %v2421 = vsel %vm463, %v2419, %v2420
  %v2422 = vrot.slane %v2286, 5
  %v2423 = vrot.slane %v2422, 4
  %v2424 = vrot.slane %v2287, 5
  %v2425 = vsel %vm463, %v2423, %v2424
  %v2426 = vrot.slane %v2288, 5
  %v2427 = vrot.slane %v2426, 4
  %v2428 = vrot.slane %v2289, 5
  %v2429 = vsel %vm463, %v2427, %v2428
  %v2430 = vrot.slane %v2290, 5
  %v2431 = vrot.slane %v2430, 4
  %v2432 = vrot.slane %v2291, 5
  %v2433 = vsel %vm463, %v2431, %v2432
  %v2434 = vunpack.c.l.b16 %v2421
  %v2435 = vunpack.c.l.b16 %v2425
  %v2436 = vunpack.c.l.b16 %v2429
  %v2437 = vunpack.c.l.b16 %v2433
  %v2438 = vpack.c.b16 %v2435, %v2434
  %v2439 = vpack.c.b16 %v2437, %v2436
  %v2441 = vsel %vm256, %v2438, 0
  %v2444 = vsel %vm256, %v2439, 0
  %2446 = vmatpush.bf16.msra.mxu0 0
  %2447 = vmatpush.bf16.msra.mxu0 0
  %2448 = vmatpush.bf16.msra.mxu0 0
  %2449 = vmatpush.bf16.msra.mxu0 0
  %2450 = vmatpush.bf16.msra.mxu0 %v1758
  %2451 = vmatpush.bf16.msra.mxu0 %v1757
  %2452 = vmatpush.bf16.msra.mxu0 %v1756
  %2453 = vmatpush.bf16.msra.mxu0 %v1755
  %2454 = vmatmul.bf16.gmra.mxu0 %v2441
  %v2455 = vpop.f32.mrf.mxu0
  %v2456 = vadd.f32 0.0, %v2455
  %v2457 = vpop.f32.mrf.mxu0
  %v2458 = vadd.f32 0.0, %v2457
  %2459 = vmatmul.bf16.gmra.mxu0 %v2444
  %v2460 = vpop.f32.mrf.mxu0
  %v2461 = vadd.f32 0.0, %v2460
  %v2462 = vpop.f32.mrf.mxu0
  %v2463 = vadd.f32 0.0, %v2462
  %2464 = vdwg.mxu0
  %v2465 = vadd.f32 %v2405, %v2456
  %v2466 = vadd.f32 %v2407, %v2458
  %v2467 = vadd.f32 %v2410, %v2461
  %v2468 = vadd.f32 %v2412, %v2463
  %v2473 = vrot.slane %v2465, 2
  %v2474 = vrot.slane %v2465, 4
  %v2475 = vrot.slane %v2465, 6
  %v2476 = vrot.slane %v2466, 2
  %v2477 = vrot.slane %v2466, 4
  %v2478 = vrot.slane %v2466, 6
  %v2479 = vrot.slane %v2467, 2
  %v2480 = vrot.slane %v2467, 4
  %v2481 = vrot.slane %v2467, 6
  %v2482 = vrot.slane %v2468, 2
  %v2483 = vrot.slane %v2468, 4
  %v2484 = vrot.slane %v2468, 6
  %v2485 = vrot.slane %v2465, 1
  %v2486 = vrot.slane %v2473, 1
  %v2487 = vrot.slane %v2474, 1
  %v2488 = vrot.slane %v2475, 1
  %v2489 = vrot.slane %v2466, 1
  %v2490 = vrot.slane %v2476, 1
  %v2491 = vrot.slane %v2477, 1
  %v2492 = vrot.slane %v2478, 1
  %v2493 = vrot.slane %v2467, 1
  %v2494 = vrot.slane %v2479, 1
  %v2495 = vrot.slane %v2480, 1
  %v2496 = vrot.slane %v2481, 1
  %v2497 = vrot.slane %v2468, 1
  %v2498 = vrot.slane %v2482, 1
  %v2499 = vrot.slane %v2483, 1
  %v2500 = vrot.slane %v2484, 1
  %v2533 = vadd.f32 %v1935, %v2465
  %v2534 = vadd.f32 %v1936, %v2485
  %v2535 = vadd.f32 %v1937, %v2473
  %v2536 = vadd.f32 %v1938, %v2486
  %v2537 = vadd.f32 %v1939, %v2474
  %v2538 = vadd.f32 %v1940, %v2487
  %v2539 = vadd.f32 %v1941, %v2475
  %v2540 = vadd.f32 %v1942, %v2488
  %v2541 = vadd.f32 %v1943, %v2466
  %v2542 = vadd.f32 %v1944, %v2489
  %v2543 = vadd.f32 %v1945, %v2476
  %v2544 = vadd.f32 %v1946, %v2490
  %v2545 = vadd.f32 %v1947, %v2477
  %v2546 = vadd.f32 %v1948, %v2491
  %v2547 = vadd.f32 %v1949, %v2478
  %v2548 = vadd.f32 %v1950, %v2492
  %v2549 = vadd.f32 %v1951, %v2467
  %v2550 = vadd.f32 %v1952, %v2493
  %v2551 = vadd.f32 %v1953, %v2479
  %v2552 = vadd.f32 %v1954, %v2494
  %v2553 = vadd.f32 %v1955, %v2480
  %v2554 = vadd.f32 %v1956, %v2495
  %v2555 = vadd.f32 %v1957, %v2481
  %v2556 = vadd.f32 %v1958, %v2496
  %v2557 = vadd.f32 %v1959, %v2468
  %v2558 = vadd.f32 %v1960, %v2497
  %v2559 = vadd.f32 %v1961, %v2482
  %v2560 = vadd.f32 %v1962, %v2498
  %v2561 = vadd.f32 %v1963, %v2483
  %v2562 = vadd.f32 %v1964, %v2499
  %v2563 = vadd.f32 %v1965, %v2484
  %v2564 = vadd.f32 %v1966, %v2500
  %v2565 = vadd.f32 %v2533, %v1061
  %v2566 = vadd.f32 %v2534, %v1891
  %v2567 = vadd.f32 %v2535, %v1888
  %v2568 = vadd.f32 %v2536, %v1892
  %v2569 = vadd.f32 %v2537, %v1889
  %v2570 = vadd.f32 %v2538, %v1893
  %v2571 = vadd.f32 %v2539, %v1890
  %v2572 = vadd.f32 %v2540, %v1894
  %v2573 = vadd.f32 %v2541, %v1061
  %v2574 = vadd.f32 %v2542, %v1891
  %v2575 = vadd.f32 %v2543, %v1888
  %v2576 = vadd.f32 %v2544, %v1892
  %v2577 = vadd.f32 %v2545, %v1889
  %v2578 = vadd.f32 %v2546, %v1893
  %v2579 = vadd.f32 %v2547, %v1890
  %v2580 = vadd.f32 %v2548, %v1894
  %v2581 = vadd.f32 %v2549, %v1061
  %v2582 = vadd.f32 %v2550, %v1891
  %v2583 = vadd.f32 %v2551, %v1888
  %v2584 = vadd.f32 %v2552, %v1892
  %v2585 = vadd.f32 %v2553, %v1889
  %v2586 = vadd.f32 %v2554, %v1893
  %v2587 = vadd.f32 %v2555, %v1890
  %v2588 = vadd.f32 %v2556, %v1894
  %v2589 = vadd.f32 %v2557, %v1061
  %v2590 = vadd.f32 %v2558, %v1891
  %v2591 = vadd.f32 %v2559, %v1888
  %v2592 = vadd.f32 %v2560, %v1892
  %v2593 = vadd.f32 %v2561, %v1889
  %v2594 = vadd.f32 %v2562, %v1893
  %v2595 = vadd.f32 %v2563, %v1890
  %v2596 = vadd.f32 %v2564, %v1894
  %v2629 = vperm.slane %v2565, 0
  %v2630 = vperm.slane %v2566, 0
  %v2631 = vperm.slane %v2567, 0
  %v2632 = vperm.slane %v2568, 0
  %v2633 = vperm.slane %v2569, 0
  %v2634 = vperm.slane %v2570, 0
  %v2635 = vperm.slane %v2571, 0
  %v2636 = vperm.slane %v2572, 0
  %v2637 = vperm.slane %v2573, 0
  %v2638 = vperm.slane %v2574, 0
  %v2639 = vperm.slane %v2575, 0
  %v2640 = vperm.slane %v2576, 0
  %v2641 = vperm.slane %v2577, 0
  %v2642 = vperm.slane %v2578, 0
  %v2643 = vperm.slane %v2579, 0
  %v2644 = vperm.slane %v2580, 0
  %v2645 = vperm.slane %v2581, 0
  %v2646 = vperm.slane %v2582, 0
  %v2647 = vperm.slane %v2583, 0
  %v2648 = vperm.slane %v2584, 0
  %v2649 = vperm.slane %v2585, 0
  %v2650 = vperm.slane %v2586, 0
  %v2651 = vperm.slane %v2587, 0
  %v2652 = vperm.slane %v2588, 0
  %v2653 = vperm.slane %v2589, 0
  %v2654 = vperm.slane %v2590, 0
  %v2655 = vperm.slane %v2591, 0
  %v2656 = vperm.slane %v2592, 0
  %v2657 = vperm.slane %v2593, 0
  %v2658 = vperm.slane %v2594, 0
  %v2659 = vperm.slane %v2595, 0
  %v2660 = vperm.slane %v2596, 0
  %vm2661 = vcmask 1041409
  %v2662 = vsel %vm2661, %v2630, %v2629
  %v2663 = vsel %vm793, %v2631, %v2662
  %v2664 = vsel %vm795, %v2632, %v2663
  %v2665 = vsel %vm797, %v2633, %v2664
  %v2666 = vsel %vm799, %v2634, %v2665
  %v2667 = vsel %vm801, %v2635, %v2666
  %v2668 = vsel %vm803, %v2636, %v2667
  %v2669 = vsel %vm2661, %v2638, %v2637
  %v2670 = vsel %vm793, %v2639, %v2669
  %v2671 = vsel %vm795, %v2640, %v2670
  %v2672 = vsel %vm797, %v2641, %v2671
  %v2673 = vsel %vm799, %v2642, %v2672
  %v2674 = vsel %vm801, %v2643, %v2673
  %v2675 = vsel %vm803, %v2644, %v2674
  %v2676 = vsel %vm2661, %v2646, %v2645
  %v2677 = vsel %vm793, %v2647, %v2676
  %v2678 = vsel %vm795, %v2648, %v2677
  %v2679 = vsel %vm797, %v2649, %v2678
  %v2680 = vsel %vm799, %v2650, %v2679
  %v2681 = vsel %vm801, %v2651, %v2680
  %v2682 = vsel %vm803, %v2652, %v2681
  %v2683 = vsel %vm2661, %v2654, %v2653
  %v2684 = vsel %vm793, %v2655, %v2683
  %v2685 = vsel %vm795, %v2656, %v2684
  %v2686 = vsel %vm797, %v2657, %v2685
  %v2687 = vsel %vm799, %v2658, %v2686
  %v2688 = vsel %vm801, %v2659, %v2687
  %v2689 = vsel %vm803, %v2660, %v2688
  %2694 = vst.msk [vmem:[%s7] sm:$0xff] %vm256, %v2668
  %2695 = vst.msk [vmem:[%s7 + $0x8] sm:$0xff] %vm256, %v2675
  %2696 = vst.msk [vmem:[%s7 + $0x10] sm:$0xff] %vm256, %v2682
  %2697 = vst.msk [vmem:[%s7 + $0x18] sm:$0xff] %vm256, %v2689
  // Predicated region
  $region30: #{convnet_block_forward.1} parent=0 // pred_check
    _
  $region31: #{convnet_block_forward.1} parent=0 // pred_check_branch
    %2699 = sbr.rel (0) target = $region33
  $region32: #{convnet_block_forward.1} parent=0 // pred_region
    _
  $region33: #{convnet_block_forward.1} parent=0 // pred_fallthru
    _
  // Predicated region
  $region34: #{convnet_block_forward.1} parent=0 // pred_check
    _
  $region35: #{convnet_block_forward.1} parent=0 // pred_check_branch
    %2701 = sbr.rel (0) target = $region37
  $region36: #{convnet_block_forward.1} parent=0 // pred_region
    _
  $region37: #{convnet_block_forward.1} parent=0 // pred_fallthru
    _

</llo_original>
